<compile_context>
chip_gen: v7x
topology: tpu7x:2x2x1
jax: 0.10.0
libtpu: 0.0.40
codegen_flags: <defaults>
</compile_context>

<pallas_src>
import functools

import jax
import jax.numpy as jnp
from jax.experimental import pallas as pl
from jax.experimental.pallas import tpu as pltpu

LANES = 128
STRIP = 16                 # rows per in-kernel strip (= bf16 native sublane tile)
NEG_BIG = -16384.0         # finite stand-in for -inf logits; exact in bf16
N_OUT = 6                  # per-layer accumulated quantities


def _round_up(x, m):
    return ((x + m - 1) // m) * m


# ----------------------------------------------------------------------------- kernel
def _loss_kernel(x_ref, o_ref, *, num_cls, reg_dim, gamma, alpha,
                 cls_threshold, n_strips):
    r = pl.program_id(2)

    @pl.when(r == 0)
    def _init():
        o_ref[...] = jnp.zeros_like(o_ref)

    C, D = num_cls, reg_dim
    LBL = C                # label plane
    REG = C + 1            # reg predictions (D planes)
    TGT = REG + D          # reg targets (D planes)
    RW = TGT + D           # reg weights (sampler * static, D planes)
    DIR = RW + D           # 2 direction logits

    f32 = jnp.float32
    zeros = jnp.zeros((STRIP, LANES), f32)
    a_cls = a_valid = a_mask = a_reg = a_dreg = a_dce = zeros

    for s in range(n_strips):
        lo, hi = s * STRIP, (s + 1) * STRIP

        def ld(f, _lo=lo, _hi=hi):
            return x_ref[f, _lo:_hi, :].astype(f32)

        label = ld(LBL)

        # ---- sigmoid focal classification loss (per real class plane) ----
        cls_sum = zeros
        p_max = None
        for c in range(C):
            logit = ld(c)
            tgt = (label == float(c)).astype(f32)            # in-kernel one-hot
            cw = (logit > 0.5 * NEG_BIG).astype(f32)         # -inf sentinel -> weight 0
            e = jnp.exp(-jnp.abs(logit))                     # shared exp
            bce = jnp.maximum(logit, 0.0) - logit * tgt + jnp.log1p(e)
            inv = pl.reciprocal(1.0 + e, approx=True)
            p = jnp.where(logit >= 0.0, inv, e * inv)        # sigmoid(logit)
            pt = (1.0 - p) * tgt + p * (1.0 - tgt)
            mod = pt * pt if gamma == 2.0 else jnp.power(pt, gamma)
            fw = (alpha * tgt + (1.0 - alpha) * (1.0 - tgt)) * mod
            cls_sum = cls_sum + bce * fw * cw
            p_max = p if c == 0 else jnp.maximum(p_max, p)   # = sigmoid(max logit)
        a_cls = a_cls + cls_sum

        # ---- single pass over reg planes: masks + weighted L1 (sin-diff on yaw) ----
        valid = zeros      # target row not all-zero (NaN counts, as in torch)
        reg_any = zeros    # prediction row not all-zero (torch reg_elm_weights)
        reg_sum = zeros
        cos_d = None
        yaw_t = None
        for j in range(D):
            pred = ld(REG + j)
            tgt_raw = ld(TGT + j)
            w = ld(RW + j)
            valid = jnp.maximum(valid, (tgt_raw != 0.0).astype(f32))
            reg_any = jnp.maximum(reg_any, (pred != 0.0).astype(f32))
            tgt = jnp.where(jnp.isnan(tgt_raw), 0.0, tgt_raw)
            if j == D - 1:                                   # yaw column
                d = pred - tgt
                diff = jnp.abs(jnp.sin(d))                   # |sin(p)cos(t)-cos(p)sin(t)|
                cos_d = jnp.cos(d)
                yaw_t = tgt
            else:
                diff = jnp.abs(pred - tgt)
            reg_sum = reg_sum + diff * w
        a_valid = a_valid + valid

        if cls_threshold > 0.0:
            maskf = valid * (p_max > cls_threshold).astype(f32)
        else:
            maskf = valid
        a_mask = a_mask + maskf
        wmask = reg_any * maskf
        a_reg = a_reg + reg_sum * wmask

        # ---- direction loss: (1 - cos(dyaw)) and 2-way cross-entropy ----
        d0 = ld(DIR)
        d1 = ld(DIR + 1)
        lse = jnp.maximum(d0, d1) + jnp.log1p(jnp.exp(-jnp.abs(d0 - d1)))
        ce = lse - jnp.where(yaw_t > 0.0, d1, d0)            # target bin = (rot_gt > 0)
        a_dreg = a_dreg + (1.0 - cos_d) * maskf
        a_dce = a_dce + ce * maskf

    # elementwise accumulate into the resident output block (no XLU reductions here)
    o_ref[0, :, :] += a_cls
    o_ref[1, :, :] += a_valid
    o_ref[2, :, :] += a_mask
    o_ref[3, :, :] += a_reg
    o_ref[4, :, :] += a_dreg
    o_ref[5, :, :] += a_dce


# ------------------------------------------------------------------------------ glue
def _pack_layer(cls, reg, dirv, cls_target, reg_target, sampler_reg_w,
                static_reg_w, reg_dim, m_pad, out_dtype):
    """Pack one decoder layer plane-major into a lane-dense (F, R, 128) slab."""
    B, N, C = cls.shape
    M = B * N
    R = m_pad // LANES
    f32 = jnp.float32

    def planes(x_mk, fill=0.0):
        # (M, k) -> (k, R, 128), padding the query axis with `fill`
        k = x_mk.shape[1]
        x = jnp.pad(x_mk.T, ((0, 0), (0, m_pad - M)), constant_values=fill)
        return x.reshape(k, R, LANES)

    cls_f = cls.reshape(M, C).astype(f32)
    cls_f = jnp.where(jnp.isneginf(cls_f), NEG_BIG, cls_f)
    label = jnp.broadcast_to(jnp.asarray(cls_target), (B, N)).reshape(M, 1).astype(f32)
    regp = reg[..., :reg_dim].reshape(M, reg_dim).astype(f32)
    regt = reg_target[..., :reg_dim].reshape(M, reg_dim).astype(f32)
    rw = (sampler_reg_w[..., :reg_dim].reshape(M, reg_dim) * static_reg_w).astype(f32)
    dirf = dirv.reshape(M, -1).astype(f32)

    feat = jnp.concatenate(
        [planes(cls_f, NEG_BIG),          # padded rows: cls weight -> 0 in kernel
         planes(label, float(C)),         # padded rows: background label
         planes(regp), planes(regt), planes(rw), planes(dirf)], axis=0)
    return feat.astype(out_dtype)         # (F, R, 128)


def multi_detr_dir_loss(result, targets, args, *, rows_per_step=64, cores=2,
                        slab_dtype=jnp.bfloat16):
    """JAX/Pallas version of MultiDetrdirLoss.forward.

    result:  dict with 'cls_scores', 'reg_preds', 'dm' (lists per decoder layer).
    targets: dict with per-layer 'cls_target' (B,N) int, 'reg_target' (B,N,7),
             'reg_weights' (B,N,7) standing in for the SparseBox3DTarget sampler."""
    cls_scores = result['cls_scores']
    reg_preds = result['reg_preds']
    dir_preds = result.get('dm', None)

    layer_ids = [i for i, c in enumerate(cls_scores) if c is not None]
    L = len(layer_ids)
    B, N, C = cls_scores[layer_ids[0]].shape
    reg_dim = len(args['reg_weights'])
    static_w = jnp.asarray(args['reg_weights'], jnp.float32)

    M = B * N
    r_needed = -(-M // LANES)
    rows_per_step = max(STRIP, _round_up(rows_per_step, STRIP))
    tr = max(STRIP, min(rows_per_step, _round_up(-(-r_needed // cores), STRIP)))
    R = _round_up(r_needed, cores * tr)
    m_pad = R * LANES
    steps_per_core = R // (cores * tr)
    n_feat = C + 1 + 3 * reg_dim + 2
    n_strips = tr // STRIP

    zero_dir = jnp.zeros((B, N, 2), jnp.float32)
    slab = jnp.stack([
        _pack_layer(cls_scores[i], reg_preds[i],
                    dir_preds[i] if dir_preds is not None else zero_dir,
                    targets['cls_target'][i], targets['reg_target'][i],
                    targets['reg_weights'][i], static_w, reg_dim, m_pad, slab_dtype)
        for i in layer_ids])                                  # (L, F, R, 128)

    kernel = functools.partial(
        _loss_kernel,
        num_cls=C, reg_dim=reg_dim,
        gamma=float(args['focalloss']['gamma']),
        alpha=float(args['focalloss']['alpha']),
        cls_threshold=float(args['cls_threshold_to_reg']),
        n_strips=n_strips)

    out = pl.pallas_call(
        kernel,
        out_shape=jax.ShapeDtypeStruct((cores, L, N_OUT, STRIP, LANES), jnp.float32),
        grid=(cores, L, steps_per_core),
        in_specs=[pl.BlockSpec((None, n_feat, tr, LANES),
                               lambda c, l, r: (l, 0, c * steps_per_core + r, 0))],
        out_specs=pl.BlockSpec((None, None, N_OUT, STRIP, LANES),
                               lambda c, l, r: (c, l, 0, 0, 0)),
        compiler_params=pltpu.CompilerParams(
            dimension_semantics=("parallel", "parallel", "arbitrary")),
        cost_estimate=pl.CostEstimate(
            flops=int(L * m_pad * (18 * C + 8 * reg_dim + 24)),
            transcendentals=int(L * m_pad * (2 * C + 4)),
            bytes_accessed=int(slab.size * slab.dtype.itemsize
                               + cores * L * N_OUT * STRIP * LANES * 4)),
    )(slab)

    # tiny finalize in XLA: reduce over core-split + (16,128), then normalize.
    sums = out.sum(axis=(0, 3, 4))                            # (L, 6)
    cls_w = float(args['focalloss']['loss_weight'])
    reg_w = float(args['reg_weight'])
    dir_w = float(args['dir_args']['dir_weight'])
    dir_split = 0.8

    total = jnp.float32(0.0)
    loss_dict = {}
    for k, idx in enumerate(layer_ids):
        s_cls, n_valid, n_mask = sums[k, 0], sums[k, 1], sums[k, 2]
        s_reg, s_dreg, s_dce = sums[k, 3], sums[k, 4], sums[k, 5]
        # TODO(synk): reduce_mean over torch.distributed is identity on a single device.
        num_pos = jnp.maximum(n_valid, 1.0)
        cls_loss = cls_w * s_cls / num_pos
        reg_loss = reg_w * s_reg / num_pos
        # torch's masked mean would be NaN for an empty mask; clamp to keep it finite.
        inv_nm = 1.0 / jnp.maximum(n_mask, 1.0)
        dir_loss = dir_w * (dir_split * s_dreg + (1.0 - dir_split) * s_dce) * inv_nm
        if dir_preds is None:
            dir_loss = jnp.float32(0.0)
        total = total + cls_loss + reg_loss + dir_loss
        loss_dict[f'loss_cls_{idx}'] = cls_loss
        loss_dict[f'loss_reg_{idx}'] = reg_loss
        loss_dict[f'loss_dir_{idx}'] = dir_loss
    if 'depth_loss' in result:
        total = total + result['depth_loss']
        loss_dict['depth_loss'] = result['depth_loss']
    loss_dict['total_loss'] = total
    return total, loss_dict


# ------------------------------------------------------------------------------ main
if __name__ == "__main__":
    B, N, C, REG_DIM, NUM_LAYERS = 2, 128, 1, 7, 2
    NUM_POS_PER_BATCH = 8

    args = {
        'reg_weights': [2.0, 2.0, 2.0, 1.0, 1.0, 1.0, 1.0],
        'reg_weight': 0.25,
        'cls_threshold_to_reg': 0.05,
        'focalloss': {'use_sigmoid': True, 'gamma': 2.0, 'alpha': 0.25,
                      'reduction': 'mean', 'loss_weight': 2.0},
        'dir_args': {'dir_weight': 0.2, 'args': {'dir_offset': 0.7853, 'num_bins': 2}},
        'use_dir': True,
    }

    key = jax.random.PRNGKey(0)
    keys = jax.random.split(key, 4 * NUM_LAYERS)

    cls_scores, reg_preds, dir_preds = [], [], []
    cls_targets, reg_targets, reg_weights_s = [], [], []

    # synthetic matched targets: first NUM_POS_PER_BATCH queries of each batch are positives
    pos_2d = jnp.broadcast_to((jnp.arange(N) < NUM_POS_PER_BATCH)[None, :], (B, N))
    pos_3d = pos_2d[..., None]
    for layer in range(NUM_LAYERS):
        k0, k1, k2, k3 = keys[4 * layer: 4 * layer + 4]
        cls = jax.random.normal(k0, (B, N, C), jnp.float32)
        # exercise the -inf logit path (torch zeroes its cls weight)
        cls = cls.at[0, N - 1, 0].set(-jnp.inf)
        cls_scores.append(cls)
        reg_preds.append(0.5 * jax.random.normal(k1, (B, N, REG_DIM), jnp.float32))
        dir_preds.append(jax.random.normal(k2, (B, N, 2), jnp.float32))

        # class 0 for matched queries, background label (= C) otherwise
        cls_targets.append(jnp.where(pos_2d, 0, C).astype(jnp.int32))
        gt_box = jax.random.normal(k3, (B, N, REG_DIM), jnp.float32) + 0.1
        gt_box = gt_box.at[0, 0, 2].set(jnp.nan)   # exercise the NaN-target path
        reg_targets.append(jnp.where(pos_3d, gt_box, 0.0))
        reg_weights_s.append(jnp.ones((B, N, REG_DIM), jnp.float32))

    result = {'cls_scores': cls_scores, 'reg_preds': reg_preds, 'dm': dir_preds}
    targets = {'cls_target': cls_targets, 'reg_target': reg_targets,
               'reg_weights': reg_weights_s}

    total_loss, loss_dict = multi_detr_dir_loss(result, targets, args)
    total_loss = jax.block_until_ready(total_loss)
    assert jnp.isfinite(total_loss)
    print("KERNEL_OK")
</pallas_src>

<mosaic_0001>
module attributes {stable_mosaic.version = 11 : i64} {
  func.func @_loss_kernel(%arg0: i32, %arg1: i32, %arg2: i32, %arg3: memref<1x25x16x128xbf16, #tpu.memory_space<vmem>>, %arg4: memref<1x1x6x16x128xf32, #tpu.memory_space<vmem>>) attributes {dimension_semantics = [#tpu.dimension_semantics<parallel>, #tpu.dimension_semantics<parallel>, #tpu.dimension_semantics<arbitrary>], iteration_bounds = array<i64: 2, 2, 1>, scalar_prefetch = 0 : i64, scratch_operands = 0 : i64, tpu.core_type = #tpu.core_type<tc>, window_params = [{transform_indices = @transform_0, window_bounds = array<i64: 1, 25, 16, 128>}, {transform_indices = @transform_1, window_bounds = array<i64: 1, 1, 6, 16, 128>}]} {
    %c0_i32 = arith.constant 0 : i32
    %0 = arith.cmpi eq, %arg2, %c0_i32 : i32
    %1 = arith.extui %0 : i1 to i32
    %c0_i32_0 = arith.constant 0 : i32
    %2 = arith.cmpi ne, %1, %c0_i32_0 : i32
    scf.if %2 {
      %cst_172 = arith.constant 0.000000e+00 : f32
      %309 = vector.broadcast %cst_172 : f32 to vector<6x16x128xf32>
      %c0_173 = arith.constant 0 : index
      %c0_174 = arith.constant 0 : index
      %c0_175 = arith.constant 0 : index
      %c0_176 = arith.constant 0 : index
      %c0_177 = arith.constant 0 : index
      %310 = vector.load %arg4[%c0_173, %c0_174, %c0_175, %c0_176, %c0_177] : memref<1x1x6x16x128xf32, #tpu.memory_space<vmem>>, vector<1x1x6x16x128xf32>
      %311 = vector.shape_cast %310 : vector<1x1x6x16x128xf32> to vector<6x16x128xf32>
      %312 = vector.shape_cast %309 : vector<6x16x128xf32> to vector<1x1x6x16x128xf32>
      tpu.vector_store %arg4[%c0_173, %c0_174, %c0_175, %c0_176, %c0_177], %312 {strides = array<i32>} : memref<1x1x6x16x128xf32, #tpu.memory_space<vmem>>, vector<1x1x6x16x128xf32>,
    } else {
    }
    %cst = arith.constant 0.000000e+00 : f32
    %3 = vector.broadcast %cst : f32 to vector<16x128xf32>
    %c0 = arith.constant 0 : index
    %c1 = arith.constant 1 : index
    %c0_1 = arith.constant 0 : index
    %c0_2 = arith.constant 0 : index
    %4 = vector.load %arg3[%c0, %c1, %c0_1, %c0_2] : memref<1x25x16x128xbf16, #tpu.memory_space<vmem>>, vector<1x1x16x128xbf16>
    %5 = vector.shape_cast %4 : vector<1x1x16x128xbf16> to vector<16x128xbf16>
    %6 = arith.extf %5 : vector<16x128xbf16> to vector<16x128xf32>
    %c0_3 = arith.constant 0 : index
    %c0_4 = arith.constant 0 : index
    %c0_5 = arith.constant 0 : index
    %c0_6 = arith.constant 0 : index
    %7 = vector.load %arg3[%c0_3, %c0_4, %c0_5, %c0_6] : memref<1x25x16x128xbf16, #tpu.memory_space<vmem>>, vector<1x1x16x128xbf16>
    %8 = vector.shape_cast %7 : vector<1x1x16x128xbf16> to vector<16x128xbf16>
    %9 = arith.extf %8 : vector<16x128xbf16> to vector<16x128xf32>
    %cst_7 = arith.constant 0.000000e+00 : f32
    %10 = vector.broadcast %cst_7 : f32 to vector<16x128xf32>
    %11 = arith.cmpf oeq, %6, %10 : vector<16x128xf32>
    %12 = arith.extui %11 : vector<16x128xi1> to vector<16x128xi32>
    %13 = arith.sitofp %12 : vector<16x128xi32> to vector<16x128xf32>
    %cst_8 = arith.constant -8.192000e+03 : f32
    %14 = vector.broadcast %cst_8 : f32 to vector<16x128xf32>
    %15 = arith.cmpf ogt, %9, %14 : vector<16x128xf32>
    %16 = arith.extui %15 : vector<16x128xi1> to vector<16x128xi32>
    %17 = arith.sitofp %16 : vector<16x128xi32> to vector<16x128xf32>
    %18 = math.absf %9 : vector<16x128xf32>
    %cst_9 = arith.constant 0.000000e+00 : f32
    %19 = vector.broadcast %cst_9 : f32 to vector<16x128xf32>
    %20 = arith.subf %19, %18 : vector<16x128xf32>
    %21 = math.exp %20 : vector<16x128xf32>
    %cst_10 = arith.constant 0.000000e+00 : f32
    %22 = vector.broadcast %cst_10 : f32 to vector<16x128xf32>
    %23 = arith.maximumf %9, %22 : vector<16x128xf32>
    %24 = arith.mulf %9, %13 : vector<16x128xf32>
    %25 = arith.subf %23, %24 : vector<16x128xf32>
    %26 = math.log1p %21 : vector<16x128xf32>
    %27 = arith.addf %25, %26 : vector<16x128xf32>
    %cst_11 = arith.constant 1.000000e+00 : f32
    %28 = vector.broadcast %cst_11 : f32 to vector<16x128xf32>
    %29 = arith.addf %28, %21 : vector<16x128xf32>
    %30 = tpu.reciprocal %29 {approx = true} : vector<16x128xf32> -> vector<16x128xf32>
    %cst_12 = arith.constant 0.000000e+00 : f32
    %31 = vector.broadcast %cst_12 : f32 to vector<16x128xf32>
    %32 = arith.cmpf oge, %9, %31 : vector<16x128xf32>
    %33 = arith.mulf %21, %30 : vector<16x128xf32>
    %34 = arith.select %32, %30, %33 : vector<16x128xi1>, vector<16x128xf32>
    %cst_13 = arith.constant 1.000000e+00 : f32
    %35 = vector.broadcast %cst_13 : f32 to vector<16x128xf32>
    %36 = arith.subf %35, %34 : vector<16x128xf32>
    %37 = arith.mulf %36, %13 : vector<16x128xf32>
    %cst_14 = arith.constant 1.000000e+00 : f32
    %38 = vector.broadcast %cst_14 : f32 to vector<16x128xf32>
    %39 = arith.subf %38, %13 : vector<16x128xf32>
    %40 = arith.mulf %34, %39 : vector<16x128xf32>
    %41 = arith.addf %37, %40 : vector<16x128xf32>
    %42 = arith.mulf %41, %41 : vector<16x128xf32>
    %cst_15 = arith.constant 2.500000e-01 : f32
    %43 = vector.broadcast %cst_15 : f32 to vector<16x128xf32>
    %44 = arith.mulf %43, %13 : vector<16x128xf32>
    %cst_16 = arith.constant 1.000000e+00 : f32
    %45 = vector.broadcast %cst_16 : f32 to vector<16x128xf32>
    %46 = arith.subf %45, %13 : vector<16x128xf32>
    %cst_17 = arith.constant 7.500000e-01 : f32
    %47 = vector.broadcast %cst_17 : f32 to vector<16x128xf32>
    %48 = arith.mulf %47, %46 : vector<16x128xf32>
    %49 = arith.addf %44, %48 : vector<16x128xf32>
    %50 = arith.mulf %49, %42 : vector<16x128xf32>
    %51 = arith.mulf %27, %50 : vector<16x128xf32>
    %52 = arith.mulf %51, %17 : vector<16x128xf32>
    %53 = arith.addf %3, %52 : vector<16x128xf32>
    %54 = arith.addf %3, %53 : vector<16x128xf32>
    %c0_18 = arith.constant 0 : index
    %c2 = arith.constant 2 : index
    %c0_19 = arith.constant 0 : index
    %c0_20 = arith.constant 0 : index
    %55 = vector.load %arg3[%c0_18, %c2, %c0_19, %c0_20] : memref<1x25x16x128xbf16, #tpu.memory_space<vmem>>, vector<1x1x16x128xbf16>
    %56 = vector.shape_cast %55 : vector<1x1x16x128xbf16> to vector<16x128xbf16>
    %57 = arith.extf %56 : vector<16x128xbf16> to vector<16x128xf32>
    %c0_21 = arith.constant 0 : index
    %c9 = arith.constant 9 : index
    %c0_22 = arith.constant 0 : index
    %c0_23 = arith.constant 0 : index
    %58 = vector.load %arg3[%c0_21, %c9, %c0_22, %c0_23] : memref<1x25x16x128xbf16, #tpu.memory_space<vmem>>, vector<1x1x16x128xbf16>
    %59 = vector.shape_cast %58 : vector<1x1x16x128xbf16> to vector<16x128xbf16>
    %60 = arith.extf %59 : vector<16x128xbf16> to vector<16x128xf32>
    %c0_24 = arith.constant 0 : index
    %c16 = arith.constant 16 : index
    %c0_25 = arith.constant 0 : index
    %c0_26 = arith.constant 0 : index
    %61 = vector.load %arg3[%c0_24, %c16, %c0_25, %c0_26] : memref<1x25x16x128xbf16, #tpu.memory_space<vmem>>, vector<1x1x16x128xbf16>
    %62 = vector.shape_cast %61 : vector<1x1x16x128xbf16> to vector<16x128xbf16>
    %63 = arith.extf %62 : vector<16x128xbf16> to vector<16x128xf32>
    %cst_27 = arith.constant 0.000000e+00 : f32
    %64 = vector.broadcast %cst_27 : f32 to vector<16x128xf32>
    %65 = arith.cmpf one, %60, %64 : vector<16x128xf32>
    %66 = arith.extui %65 : vector<16x128xi1> to vector<16x128xi32>
    %67 = arith.sitofp %66 : vector<16x128xi32> to vector<16x128xf32>
    %68 = arith.maximumf %3, %67 : vector<16x128xf32>
    %cst_28 = arith.constant 0.000000e+00 : f32
    %69 = vector.broadcast %cst_28 : f32 to vector<16x128xf32>
    %70 = arith.cmpf one, %57, %69 : vector<16x128xf32>
    %71 = arith.extui %70 : vector<16x128xi1> to vector<16x128xi32>
    %72 = arith.sitofp %71 : vector<16x128xi32> to vector<16x128xf32>
    %73 = arith.maximumf %3, %72 : vector<16x128xf32>
    %74 = arith.cmpf one, %60, %60 : vector<16x128xf32>
    %cst_29 = arith.constant 0.000000e+00 : f32
    %75 = vector.broadcast %cst_29 : f32 to vector<16x128xf32>
    %76 = arith.select %74, %75, %60 : vector<16x128xi1>, vector<16x128xf32>
    %77 = arith.subf %57, %76 : vector<16x128xf32>
    %78 = math.absf %77 : vector<16x128xf32>
    %79 = arith.mulf %78, %63 : vector<16x128xf32>
    %80 = arith.addf %3, %79 : vector<16x128xf32>
    %c0_30 = arith.constant 0 : index
    %c3 = arith.constant 3 : index
    %c0_31 = arith.constant 0 : index
    %c0_32 = arith.constant 0 : index
    %81 = vector.load %arg3[%c0_30, %c3, %c0_31, %c0_32] : memref<1x25x16x128xbf16, #tpu.memory_space<vmem>>, vector<1x1x16x128xbf16>
    %82 = vector.shape_cast %81 : vector<1x1x16x128xbf16> to vector<16x128xbf16>
    %83 = arith.extf %82 : vector<16x128xbf16> to vector<16x128xf32>
    %c0_33 = arith.constant 0 : index
    %c10 = arith.constant 10 : index
    %c0_34 = arith.constant 0 : index
    %c0_35 = arith.constant 0 : index
    %84 = vector.load %arg3[%c0_33, %c10, %c0_34, %c0_35] : memref<1x25x16x128xbf16, #tpu.memory_space<vmem>>, vector<1x1x16x128xbf16>
    %85 = vector.shape_cast %84 : vector<1x1x16x128xbf16> to vector<16x128xbf16>
    %86 = arith.extf %85 : vector<16x128xbf16> to vector<16x128xf32>
    %c0_36 = arith.constant 0 : index
    %c17 = arith.constant 17 : index
    %c0_37 = arith.constant 0 : index
    %c0_38 = arith.constant 0 : index
    %87 = vector.load %arg3[%c0_36, %c17, %c0_37, %c0_38] : memref<1x25x16x128xbf16, #tpu.memory_space<vmem>>, vector<1x1x16x128xbf16>
    %88 = vector.shape_cast %87 : vector<1x1x16x128xbf16> to vector<16x128xbf16>
    %89 = arith.extf %88 : vector<16x128xbf16> to vector<16x128xf32>
    %cst_39 = arith.constant 0.000000e+00 : f32
    %90 = vector.broadcast %cst_39 : f32 to vector<16x128xf32>
    %91 = arith.cmpf one, %86, %90 : vector<16x128xf32>
    %92 = arith.extui %91 : vector<16x128xi1> to vector<16x128xi32>
    %93 = arith.sitofp %92 : vector<16x128xi32> to vector<16x128xf32>
    %94 = arith.maximumf %68, %93 : vector<16x128xf32>
    %cst_40 = arith.constant 0.000000e+00 : f32
    %95 = vector.broadcast %cst_40 : f32 to vector<16x128xf32>
    %96 = arith.cmpf one, %83, %95 : vector<16x128xf32>
    %97 = arith.extui %96 : vector<16x128xi1> to vector<16x128xi32>
    %98 = arith.sitofp %97 : vector<16x128xi32> to vector<16x128xf32>
    %99 = arith.maximumf %73, %98 : vector<16x128xf32>
    %100 = arith.cmpf one, %86, %86 : vector<16x128xf32>
    %cst_41 = arith.constant 0.000000e+00 : f32
    %101 = vector.broadcast %cst_41 : f32 to vector<16x128xf32>
    %102 = arith.select %100, %101, %86 : vector<16x128xi1>, vector<16x128xf32>
    %103 = arith.subf %83, %102 : vector<16x128xf32>
    %104 = math.absf %103 : vector<16x128xf32>
    %105 = arith.mulf %104, %89 : vector<16x128xf32>
    %106 = arith.addf %80, %105 : vector<16x128xf32>
    %c0_42 = arith.constant 0 : index
    %c4 = arith.constant 4 : index
    %c0_43 = arith.constant 0 : index
    %c0_44 = arith.constant 0 : index
    %107 = vector.load %arg3[%c0_42, %c4, %c0_43, %c0_44] : memref<1x25x16x128xbf16, #tpu.memory_space<vmem>>, vector<1x1x16x128xbf16>
    %108 = vector.shape_cast %107 : vector<1x1x16x128xbf16> to vector<16x128xbf16>
    %109 = arith.extf %108 : vector<16x128xbf16> to vector<16x128xf32>
    %c0_45 = arith.constant 0 : index
    %c11 = arith.constant 11 : index
    %c0_46 = arith.constant 0 : index
    %c0_47 = arith.constant 0 : index
    %110 = vector.load %arg3[%c0_45, %c11, %c0_46, %c0_47] : memref<1x25x16x128xbf16, #tpu.memory_space<vmem>>, vector<1x1x16x128xbf16>
    %111 = vector.shape_cast %110 : vector<1x1x16x128xbf16> to vector<16x128xbf16>
    %112 = arith.extf %111 : vector<16x128xbf16> to vector<16x128xf32>
    %c0_48 = arith.constant 0 : index
    %c18 = arith.constant 18 : index
    %c0_49 = arith.constant 0 : index
    %c0_50 = arith.constant 0 : index
    %113 = vector.load %arg3[%c0_48, %c18, %c0_49, %c0_50] : memref<1x25x16x128xbf16, #tpu.memory_space<vmem>>, vector<1x1x16x128xbf16>
    %114 = vector.shape_cast %113 : vector<1x1x16x128xbf16> to vector<16x128xbf16>
    %115 = arith.extf %114 : vector<16x128xbf16> to vector<16x128xf32>
    %cst_51 = arith.constant 0.000000e+00 : f32
    %116 = vector.broadcast %cst_51 : f32 to vector<16x128xf32>
    %117 = arith.cmpf one, %112, %116 : vector<16x128xf32>
    %118 = arith.extui %117 : vector<16x128xi1> to vector<16x128xi32>
    %119 = arith.sitofp %118 : vector<16x128xi32> to vector<16x128xf32>
    %120 = arith.maximumf %94, %119 : vector<16x128xf32>
    %cst_52 = arith.constant 0.000000e+00 : f32
    %121 = vector.broadcast %cst_52 : f32 to vector<16x128xf32>
    %122 = arith.cmpf one, %109, %121 : vector<16x128xf32>
    %123 = arith.extui %122 : vector<16x128xi1> to vector<16x128xi32>
    %124 = arith.sitofp %123 : vector<16x128xi32> to vector<16x128xf32>
    %125 = arith.maximumf %99, %124 : vector<16x128xf32>
    %126 = arith.cmpf one, %112, %112 : vector<16x128xf32>
    %cst_53 = arith.constant 0.000000e+00 : f32
    %127 = vector.broadcast %cst_53 : f32 to vector<16x128xf32>
    %128 = arith.select %126, %127, %112 : vector<16x128xi1>, vector<16x128xf32>
    %129 = arith.subf %109, %128 : vector<16x128xf32>
    %130 = math.absf %129 : vector<16x128xf32>
    %131 = arith.mulf %130, %115 : vector<16x128xf32>
    %132 = arith.addf %106, %131 : vector<16x128xf32>
    %c0_54 = arith.constant 0 : index
    %c5 = arith.constant 5 : index
    %c0_55 = arith.constant 0 : index
    %c0_56 = arith.constant 0 : index
    %133 = vector.load %arg3[%c0_54, %c5, %c0_55, %c0_56] : memref<1x25x16x128xbf16, #tpu.memory_space<vmem>>, vector<1x1x16x128xbf16>
    %134 = vector.shape_cast %133 : vector<1x1x16x128xbf16> to vector<16x128xbf16>
    %135 = arith.extf %134 : vector<16x128xbf16> to vector<16x128xf32>
    %c0_57 = arith.constant 0 : index
    %c12 = arith.constant 12 : index
    %c0_58 = arith.constant 0 : index
    %c0_59 = arith.constant 0 : index
    %136 = vector.load %arg3[%c0_57, %c12, %c0_58, %c0_59] : memref<1x25x16x128xbf16, #tpu.memory_space<vmem>>, vector<1x1x16x128xbf16>
    %137 = vector.shape_cast %136 : vector<1x1x16x128xbf16> to vector<16x128xbf16>
    %138 = arith.extf %137 : vector<16x128xbf16> to vector<16x128xf32>
    %c0_60 = arith.constant 0 : index
    %c19 = arith.constant 19 : index
    %c0_61 = arith.constant 0 : index
    %c0_62 = arith.constant 0 : index
    %139 = vector.load %arg3[%c0_60, %c19, %c0_61, %c0_62] : memref<1x25x16x128xbf16, #tpu.memory_space<vmem>>, vector<1x1x16x128xbf16>
    %140 = vector.shape_cast %139 : vector<1x1x16x128xbf16> to vector<16x128xbf16>
    %141 = arith.extf %140 : vector<16x128xbf16> to vector<16x128xf32>
    %cst_63 = arith.constant 0.000000e+00 : f32
    %142 = vector.broadcast %cst_63 : f32 to vector<16x128xf32>
    %143 = arith.cmpf one, %138, %142 : vector<16x128xf32>
    %144 = arith.extui %143 : vector<16x128xi1> to vector<16x128xi32>
    %145 = arith.sitofp %144 : vector<16x128xi32> to vector<16x128xf32>
    %146 = arith.maximumf %120, %145 : vector<16x128xf32>
    %cst_64 = arith.constant 0.000000e+00 : f32
    %147 = vector.broadcast %cst_64 : f32 to vector<16x128xf32>
    %148 = arith.cmpf one, %135, %147 : vector<16x128xf32>
    %149 = arith.extui %148 : vector<16x128xi1> to vector<16x128xi32>
    %150 = arith.sitofp %149 : vector<16x128xi32> to vector<16x128xf32>
    %151 = arith.maximumf %125, %150 : vector<16x128xf32>
    %152 = arith.cmpf one, %138, %138 : vector<16x128xf32>
    %cst_65 = arith.constant 0.000000e+00 : f32
    %153 = vector.broadcast %cst_65 : f32 to vector<16x128xf32>
    %154 = arith.select %152, %153, %138 : vector<16x128xi1>, vector<16x128xf32>
    %155 = arith.subf %135, %154 : vector<16x128xf32>
    %156 = math.absf %155 : vector<16x128xf32>
    %157 = arith.mulf %156, %141 : vector<16x128xf32>
    %158 = arith.addf %132, %157 : vector<16x128xf32>
    %c0_66 = arith.constant 0 : index
    %c6 = arith.constant 6 : index
    %c0_67 = arith.constant 0 : index
    %c0_68 = arith.constant 0 : index
    %159 = vector.load %arg3[%c0_66, %c6, %c0_67, %c0_68] : memref<1x25x16x128xbf16, #tpu.memory_space<vmem>>, vector<1x1x16x128xbf16>
    %160 = vector.shape_cast %159 : vector<1x1x16x128xbf16> to vector<16x128xbf16>
    %161 = arith.extf %160 : vector<16x128xbf16> to vector<16x128xf32>
    %c0_69 = arith.constant 0 : index
    %c13 = arith.constant 13 : index
    %c0_70 = arith.constant 0 : index
    %c0_71 = arith.constant 0 : index
    %162 = vector.load %arg3[%c0_69, %c13, %c0_70, %c0_71] : memref<1x25x16x128xbf16, #tpu.memory_space<vmem>>, vector<1x1x16x128xbf16>
    %163 = vector.shape_cast %162 : vector<1x1x16x128xbf16> to vector<16x128xbf16>
    %164 = arith.extf %163 : vector<16x128xbf16> to vector<16x128xf32>
    %c0_72 = arith.constant 0 : index
    %c20 = arith.constant 20 : index
    %c0_73 = arith.constant 0 : index
    %c0_74 = arith.constant 0 : index
    %165 = vector.load %arg3[%c0_72, %c20, %c0_73, %c0_74] : memref<1x25x16x128xbf16, #tpu.memory_space<vmem>>, vector<1x1x16x128xbf16>
    %166 = vector.shape_cast %165 : vector<1x1x16x128xbf16> to vector<16x128xbf16>
    %167 = arith.extf %166 : vector<16x128xbf16> to vector<16x128xf32>
    %cst_75 = arith.constant 0.000000e+00 : f32
    %168 = vector.broadcast %cst_75 : f32 to vector<16x128xf32>
    %169 = arith.cmpf one, %164, %168 : vector<16x128xf32>
    %170 = arith.extui %169 : vector<16x128xi1> to vector<16x128xi32>
    %171 = arith.sitofp %170 : vector<16x128xi32> to vector<16x128xf32>
    %172 = arith.maximumf %146, %171 : vector<16x128xf32>
    %cst_76 = arith.constant 0.000000e+00 : f32
    %173 = vector.broadcast %cst_76 : f32 to vector<16x128xf32>
    %174 = arith.cmpf one, %161, %173 : vector<16x128xf32>
    %175 = arith.extui %174 : vector<16x128xi1> to vector<16x128xi32>
    %176 = arith.sitofp %175 : vector<16x128xi32> to vector<16x128xf32>
    %177 = arith.maximumf %151, %176 : vector<16x128xf32>
    %178 = arith.cmpf one, %164, %164 : vector<16x128xf32>
    %cst_77 = arith.constant 0.000000e+00 : f32
    %179 = vector.broadcast %cst_77 : f32 to vector<16x128xf32>
    %180 = arith.select %178, %179, %164 : vector<16x128xi1>, vector<16x128xf32>
    %181 = arith.subf %161, %180 : vector<16x128xf32>
    %182 = math.absf %181 : vector<16x128xf32>
    %183 = arith.mulf %182, %167 : vector<16x128xf32>
    %184 = arith.addf %158, %183 : vector<16x128xf32>
    %c0_78 = arith.constant 0 : index
    %c7 = arith.constant 7 : index
    %c0_79 = arith.constant 0 : index
    %c0_80 = arith.constant 0 : index
    %185 = vector.load %arg3[%c0_78, %c7, %c0_79, %c0_80] : memref<1x25x16x128xbf16, #tpu.memory_space<vmem>>, vector<1x1x16x128xbf16>
    %186 = vector.shape_cast %185 : vector<1x1x16x128xbf16> to vector<16x128xbf16>
    %187 = arith.extf %186 : vector<16x128xbf16> to vector<16x128xf32>
    %c0_81 = arith.constant 0 : index
    %c14 = arith.constant 14 : index
    %c0_82 = arith.constant 0 : index
    %c0_83 = arith.constant 0 : index
    %188 = vector.load %arg3[%c0_81, %c14, %c0_82, %c0_83] : memref<1x25x16x128xbf16, #tpu.memory_space<vmem>>, vector<1x1x16x128xbf16>
    %189 = vector.shape_cast %188 : vector<1x1x16x128xbf16> to vector<16x128xbf16>
    %190 = arith.extf %189 : vector<16x128xbf16> to vector<16x128xf32>
    %c0_84 = arith.constant 0 : index
    %c21 = arith.constant 21 : index
    %c0_85 = arith.constant 0 : index
    %c0_86 = arith.constant 0 : index
    %191 = vector.load %arg3[%c0_84, %c21, %c0_85, %c0_86] : memref<1x25x16x128xbf16, #tpu.memory_space<vmem>>, vector<1x1x16x128xbf16>
    %192 = vector.shape_cast %191 : vector<1x1x16x128xbf16> to vector<16x128xbf16>
    %193 = arith.extf %192 : vector<16x128xbf16> to vector<16x128xf32>
    %cst_87 = arith.constant 0.000000e+00 : f32
    %194 = vector.broadcast %cst_87 : f32 to vector<16x128xf32>
    %195 = arith.cmpf one, %190, %194 : vector<16x128xf32>
    %196 = arith.extui %195 : vector<16x128xi1> to vector<16x128xi32>
    %197 = arith.sitofp %196 : vector<16x128xi32> to vector<16x128xf32>
    %198 = arith.maximumf %172, %197 : vector<16x128xf32>
    %cst_88 = arith.constant 0.000000e+00 : f32
    %199 = vector.broadcast %cst_88 : f32 to vector<16x128xf32>
    %200 = arith.cmpf one, %187, %199 : vector<16x128xf32>
    %201 = arith.extui %200 : vector<16x128xi1> to vector<16x128xi32>
    %202 = arith.sitofp %201 : vector<16x128xi32> to vector<16x128xf32>
    %203 = arith.maximumf %177, %202 : vector<16x128xf32>
    %204 = arith.cmpf one, %190, %190 : vector<16x128xf32>
    %cst_89 = arith.constant 0.000000e+00 : f32
    %205 = vector.broadcast %cst_89 : f32 to vector<16x128xf32>
    %206 = arith.select %204, %205, %190 : vector<16x128xi1>, vector<16x128xf32>
    %207 = arith.subf %187, %206 : vector<16x128xf32>
    %208 = math.absf %207 : vector<16x128xf32>
    %209 = arith.mulf %208, %193 : vector<16x128xf32>
    %210 = arith.addf %184, %209 : vector<16x128xf32>
    %c0_90 = arith.constant 0 : index
    %c8 = arith.constant 8 : index
    %c0_91 = arith.constant 0 : index
    %c0_92 = arith.constant 0 : index
    %211 = vector.load %arg3[%c0_90, %c8, %c0_91, %c0_92] : memref<1x25x16x128xbf16, #tpu.memory_space<vmem>>, vector<1x1x16x128xbf16>
    %212 = vector.shape_cast %211 : vector<1x1x16x128xbf16> to vector<16x128xbf16>
    %213 = arith.extf %212 : vector<16x128xbf16> to vector<16x128xf32>
    %c0_93 = arith.constant 0 : index
    %c15 = arith.constant 15 : index
    %c0_94 = arith.constant 0 : index
    %c0_95 = arith.constant 0 : index
    %214 = vector.load %arg3[%c0_93, %c15, %c0_94, %c0_95] : memref<1x25x16x128xbf16, #tpu.memory_space<vmem>>, vector<1x1x16x128xbf16>
    %215 = vector.shape_cast %214 : vector<1x1x16x128xbf16> to vector<16x128xbf16>
    %216 = arith.extf %215 : vector<16x128xbf16> to vector<16x128xf32>
    %c0_96 = arith.constant 0 : index
    %c22 = arith.constant 22 : index
    %c0_97 = arith.constant 0 : index
    %c0_98 = arith.constant 0 : index
    %217 = vector.load %arg3[%c0_96, %c22, %c0_97, %c0_98] : memref<1x25x16x128xbf16, #tpu.memory_space<vmem>>, vector<1x1x16x128xbf16>
    %218 = vector.shape_cast %217 : vector<1x1x16x128xbf16> to vector<16x128xbf16>
    %219 = arith.extf %218 : vector<16x128xbf16> to vector<16x128xf32>
    %cst_99 = arith.constant 0.000000e+00 : f32
    %220 = vector.broadcast %cst_99 : f32 to vector<16x128xf32>
    %221 = arith.cmpf one, %216, %220 : vector<16x128xf32>
    %222 = arith.extui %221 : vector<16x128xi1> to vector<16x128xi32>
    %223 = arith.sitofp %222 : vector<16x128xi32> to vector<16x128xf32>
    %224 = arith.maximumf %198, %223 : vector<16x128xf32>
    %cst_100 = arith.constant 0.000000e+00 : f32
    %225 = vector.broadcast %cst_100 : f32 to vector<16x128xf32>
    %226 = arith.cmpf one, %213, %225 : vector<16x128xf32>
    %227 = arith.extui %226 : vector<16x128xi1> to vector<16x128xi32>
    %228 = arith.sitofp %227 : vector<16x128xi32> to vector<16x128xf32>
    %229 = arith.maximumf %203, %228 : vector<16x128xf32>
    %230 = arith.cmpf one, %216, %216 : vector<16x128xf32>
    %cst_101 = arith.constant 0.000000e+00 : f32
    %231 = vector.broadcast %cst_101 : f32 to vector<16x128xf32>
    %232 = arith.select %230, %231, %216 : vector<16x128xi1>, vector<16x128xf32>
    %233 = arith.subf %213, %232 : vector<16x128xf32>
    %234 = math.sin %233 : vector<16x128xf32>
    %235 = math.absf %234 : vector<16x128xf32>
    %236 = math.cos %233 : vector<16x128xf32>
    %237 = arith.mulf %235, %219 : vector<16x128xf32>
    %238 = arith.addf %210, %237 : vector<16x128xf32>
    %239 = arith.addf %3, %224 : vector<16x128xf32>
    %cst_102 = arith.constant 5.000000e-02 : f32
    %240 = vector.broadcast %cst_102 : f32 to vector<16x128xf32>
    %241 = arith.cmpf ogt, %34, %240 : vector<16x128xf32>
    %242 = arith.extui %241 : vector<16x128xi1> to vector<16x128xi32>
    %243 = arith.sitofp %242 : vector<16x128xi32> to vector<16x128xf32>
    %244 = arith.mulf %224, %243 : vector<16x128xf32>
    %245 = arith.addf %3, %244 : vector<16x128xf32>
    %246 = arith.mulf %229, %244 : vector<16x128xf32>
    %247 = arith.mulf %238, %246 : vector<16x128xf32>
    %248 = arith.addf %3, %247 : vector<16x128xf32>
    %c0_103 = arith.constant 0 : index
    %c23 = arith.constant 23 : index
    %c0_104 = arith.constant 0 : index
    %c0_105 = arith.constant 0 : index
    %249 = vector.load %arg3[%c0_103, %c23, %c0_104, %c0_105] : memref<1x25x16x128xbf16, #tpu.memory_space<vmem>>, vector<1x1x16x128xbf16>
    %250 = vector.shape_cast %249 : vector<1x1x16x128xbf16> to vector<16x128xbf16>
    %251 = arith.extf %250 : vector<16x128xbf16> to vector<16x128xf32>
    %c0_106 = arith.constant 0 : index
    %c24 = arith.constant 24 : index
    %c0_107 = arith.constant 0 : index
    %c0_108 = arith.constant 0 : index
    %252 = vector.load %arg3[%c0_106, %c24, %c0_107, %c0_108] : memref<1x25x16x128xbf16, #tpu.memory_space<vmem>>, vector<1x1x16x128xbf16>
    %253 = vector.shape_cast %252 : vector<1x1x16x128xbf16> to vector<16x128xbf16>
    %254 = arith.extf %253 : vector<16x128xbf16> to vector<16x128xf32>
    %255 = arith.maximumf %251, %254 : vector<16x128xf32>
    %256 = arith.subf %251, %254 : vector<16x128xf32>
    %257 = math.absf %256 : vector<16x128xf32>
    %cst_109 = arith.constant 0.000000e+00 : f32
    %258 = vector.broadcast %cst_109 : f32 to vector<16x128xf32>
    %259 = arith.subf %258, %257 : vector<16x128xf32>
    %260 = math.exp %259 : vector<16x128xf32>
    %261 = math.log1p %260 : vector<16x128xf32>
    %262 = arith.addf %255, %261 : vector<16x128xf32>
    %cst_110 = arith.constant 0.000000e+00 : f32
    %263 = vector.broadcast %cst_110 : f32 to vector<16x128xf32>
    %264 = arith.cmpf ogt, %232, %263 : vector<16x128xf32>
    %265 = arith.select %264, %254, %251 : vector<16x128xi1>, vector<16x128xf32>
    %266 = arith.subf %262, %265 : vector<16x128xf32>
    %cst_111 = arith.constant 1.000000e+00 : f32
    %267 = vector.broadcast %cst_111 : f32 to vector<16x128xf32>
    %268 = arith.subf %267, %236 : vector<16x128xf32>
    %269 = arith.mulf %268, %244 : vector<16x128xf32>
    %270 = arith.addf %3, %269 : vector<16x128xf32>
    %271 = arith.mulf %266, %244 : vector<16x128xf32>
    %272 = arith.addf %3, %271 : vector<16x128xf32>
    %c0_112 = arith.constant 0 : index
    %c0_113 = arith.constant 0 : index
    %c0_114 = arith.constant 0 : index
    %c0_115 = arith.constant 0 : index
    %c0_116 = arith.constant 0 : index
    %273 = vector.load %arg4[%c0_112, %c0_113, %c0_114, %c0_115, %c0_116] : memref<1x1x6x16x128xf32, #tpu.memory_space<vmem>>, vector<1x1x1x16x128xf32>
    %274 = vector.shape_cast %273 : vector<1x1x1x16x128xf32> to vector<16x128xf32>
    %275 = arith.addf %274, %54 : vector<16x128xf32>
    %c0_117 = arith.constant 0 : index
    %c0_118 = arith.constant 0 : index
    %c0_119 = arith.constant 0 : index
    %c0_120 = arith.constant 0 : index
    %c0_121 = arith.constant 0 : index
    %276 = vector.load %arg4[%c0_117, %c0_118, %c0_119, %c0_120, %c0_121] : memref<1x1x6x16x128xf32, #tpu.memory_space<vmem>>, vector<1x1x1x16x128xf32>
    %277 = vector.shape_cast %276 : vector<1x1x1x16x128xf32> to vector<16x128xf32>
    %278 = vector.shape_cast %275 : vector<16x128xf32> to vector<1x1x1x16x128xf32>
    tpu.vector_store %arg4[%c0_117, %c0_118, %c0_119, %c0_120, %c0_121], %278 {strides = array<i32>} : memref<1x1x6x16x128xf32, #tpu.memory_space<vmem>>, vector<1x1x1x16x128xf32>,
    %c0_122 = arith.constant 0 : index
    %c0_123 = arith.constant 0 : index
    %c1_124 = arith.constant 1 : index
    %c0_125 = arith.constant 0 : index
    %c0_126 = arith.constant 0 : index
    %279 = vector.load %arg4[%c0_122, %c0_123, %c1_124, %c0_125, %c0_126] : memref<1x1x6x16x128xf32, #tpu.memory_space<vmem>>, vector<1x1x1x16x128xf32>
    %280 = vector.shape_cast %279 : vector<1x1x1x16x128xf32> to vector<16x128xf32>
    %281 = arith.addf %280, %239 : vector<16x128xf32>
    %c0_127 = arith.constant 0 : index
    %c0_128 = arith.constant 0 : index
    %c1_129 = arith.constant 1 : index
    %c0_130 = arith.constant 0 : index
    %c0_131 = arith.constant 0 : index
    %282 = vector.load %arg4[%c0_127, %c0_128, %c1_129, %c0_130, %c0_131] : memref<1x1x6x16x128xf32, #tpu.memory_space<vmem>>, vector<1x1x1x16x128xf32>
    %283 = vector.shape_cast %282 : vector<1x1x1x16x128xf32> to vector<16x128xf32>
    %284 = vector.shape_cast %281 : vector<16x128xf32> to vector<1x1x1x16x128xf32>
    tpu.vector_store %arg4[%c0_127, %c0_128, %c1_129, %c0_130, %c0_131], %284 {strides = array<i32>} : memref<1x1x6x16x128xf32, #tpu.memory_space<vmem>>, vector<1x1x1x16x128xf32>,
    %c0_132 = arith.constant 0 : index
    %c0_133 = arith.constant 0 : index
    %c2_134 = arith.constant 2 : index
    %c0_135 = arith.constant 0 : index
    %c0_136 = arith.constant 0 : index
    %285 = vector.load %arg4[%c0_132, %c0_133, %c2_134, %c0_135, %c0_136] : memref<1x1x6x16x128xf32, #tpu.memory_space<vmem>>, vector<1x1x1x16x128xf32>
    %286 = vector.shape_cast %285 : vector<1x1x1x16x128xf32> to vector<16x128xf32>
    %287 = arith.addf %286, %245 : vector<16x128xf32>
    %c0_137 = arith.constant 0 : index
    %c0_138 = arith.constant 0 : index
    %c2_139 = arith.constant 2 : index
    %c0_140 = arith.constant 0 : index
    %c0_141 = arith.constant 0 : index
    %288 = vector.load %arg4[%c0_137, %c0_138, %c2_139, %c0_140, %c0_141] : memref<1x1x6x16x128xf32, #tpu.memory_space<vmem>>, vector<1x1x1x16x128xf32>
    %289 = vector.shape_cast %288 : vector<1x1x1x16x128xf32> to vector<16x128xf32>
    %290 = vector.shape_cast %287 : vector<16x128xf32> to vector<1x1x1x16x128xf32>
    tpu.vector_store %arg4[%c0_137, %c0_138, %c2_139, %c0_140, %c0_141], %290 {strides = array<i32>} : memref<1x1x6x16x128xf32, #tpu.memory_space<vmem>>, vector<1x1x1x16x128xf32>,
    %c0_142 = arith.constant 0 : index
    %c0_143 = arith.constant 0 : index
    %c3_144 = arith.constant 3 : index
    %c0_145 = arith.constant 0 : index
    %c0_146 = arith.constant 0 : index
    %291 = vector.load %arg4[%c0_142, %c0_143, %c3_144, %c0_145, %c0_146] : memref<1x1x6x16x128xf32, #tpu.memory_space<vmem>>, vector<1x1x1x16x128xf32>
    %292 = vector.shape_cast %291 : vector<1x1x1x16x128xf32> to vector<16x128xf32>
    %293 = arith.addf %292, %248 : vector<16x128xf32>
    %c0_147 = arith.constant 0 : index
    %c0_148 = arith.constant 0 : index
    %c3_149 = arith.constant 3 : index
    %c0_150 = arith.constant 0 : index
    %c0_151 = arith.constant 0 : index
    %294 = vector.load %arg4[%c0_147, %c0_148, %c3_149, %c0_150, %c0_151] : memref<1x1x6x16x128xf32, #tpu.memory_space<vmem>>, vector<1x1x1x16x128xf32>
    %295 = vector.shape_cast %294 : vector<1x1x1x16x128xf32> to vector<16x128xf32>
    %296 = vector.shape_cast %293 : vector<16x128xf32> to vector<1x1x1x16x128xf32>
    tpu.vector_store %arg4[%c0_147, %c0_148, %c3_149, %c0_150, %c0_151], %296 {strides = array<i32>} : memref<1x1x6x16x128xf32, #tpu.memory_space<vmem>>, vector<1x1x1x16x128xf32>,
    %c0_152 = arith.constant 0 : index
    %c0_153 = arith.constant 0 : index
    %c4_154 = arith.constant 4 : index
    %c0_155 = arith.constant 0 : index
    %c0_156 = arith.constant 0 : index
    %297 = vector.load %arg4[%c0_152, %c0_153, %c4_154, %c0_155, %c0_156] : memref<1x1x6x16x128xf32, #tpu.memory_space<vmem>>, vector<1x1x1x16x128xf32>
    %298 = vector.shape_cast %297 : vector<1x1x1x16x128xf32> to vector<16x128xf32>
    %299 = arith.addf %298, %270 : vector<16x128xf32>
    %c0_157 = arith.constant 0 : index
    %c0_158 = arith.constant 0 : index
    %c4_159 = arith.constant 4 : index
    %c0_160 = arith.constant 0 : index
    %c0_161 = arith.constant 0 : index
    %300 = vector.load %arg4[%c0_157, %c0_158, %c4_159, %c0_160, %c0_161] : memref<1x1x6x16x128xf32, #tpu.memory_space<vmem>>, vector<1x1x1x16x128xf32>
    %301 = vector.shape_cast %300 : vector<1x1x1x16x128xf32> to vector<16x128xf32>
    %302 = vector.shape_cast %299 : vector<16x128xf32> to vector<1x1x1x16x128xf32>
    tpu.vector_store %arg4[%c0_157, %c0_158, %c4_159, %c0_160, %c0_161], %302 {strides = array<i32>} : memref<1x1x6x16x128xf32, #tpu.memory_space<vmem>>, vector<1x1x1x16x128xf32>,
    %c0_162 = arith.constant 0 : index
    %c0_163 = arith.constant 0 : index
    %c5_164 = arith.constant 5 : index
    %c0_165 = arith.constant 0 : index
    %c0_166 = arith.constant 0 : index
    %303 = vector.load %arg4[%c0_162, %c0_163, %c5_164, %c0_165, %c0_166] : memref<1x1x6x16x128xf32, #tpu.memory_space<vmem>>, vector<1x1x1x16x128xf32>
    %304 = vector.shape_cast %303 : vector<1x1x1x16x128xf32> to vector<16x128xf32>
    %305 = arith.addf %304, %272 : vector<16x128xf32>
    %c0_167 = arith.constant 0 : index
    %c0_168 = arith.constant 0 : index
    %c5_169 = arith.constant 5 : index
    %c0_170 = arith.constant 0 : index
    %c0_171 = arith.constant 0 : index
    %306 = vector.load %arg4[%c0_167, %c0_168, %c5_169, %c0_170, %c0_171] : memref<1x1x6x16x128xf32, #tpu.memory_space<vmem>>, vector<1x1x1x16x128xf32>
    %307 = vector.shape_cast %306 : vector<1x1x1x16x128xf32> to vector<16x128xf32>
    %308 = vector.shape_cast %305 : vector<16x128xf32> to vector<1x1x1x16x128xf32>
    tpu.vector_store %arg4[%c0_167, %c0_168, %c5_169, %c0_170, %c0_171], %308 {strides = array<i32>} : memref<1x1x6x16x128xf32, #tpu.memory_space<vmem>>, vector<1x1x1x16x128xf32>,
    return
  }
  func.func @transform_0(%arg0: i32, %arg1: i32, %arg2: i32) -> (i32, i32, i32, i32) {
    %c1_i32 = arith.constant 1 : i32
    %0 = arith.muli %arg0, %c1_i32 : i32
    %1 = arith.addi %0, %arg2 : i32
    %c0_i32 = arith.constant 0 : i32
    %c0_i32_0 = arith.constant 0 : i32
    %c0_i32_1 = arith.constant 0 : i32
    return %arg1, %c0_i32, %1, %c0_i32_0 : i32, i32, i32, i32
  }
  func.func @transform_1(%arg0: i32, %arg1: i32, %arg2: i32) -> (i32, i32, i32, i32, i32) {
    %c0_i32 = arith.constant 0 : i32
    %c0_i32_0 = arith.constant 0 : i32
    %c0_i32_1 = arith.constant 0 : i32
    %c0_i32_2 = arith.constant 0 : i32
    return %arg0, %arg1, %c0_i32, %c0_i32_0, %c0_i32_1 : i32, i32, i32, i32, i32
  }
}

</mosaic_0001>

<llo_original>
// kernel: tpu_custom_call.1
$region0: #{tpu_custom_call.1}
  #allocation0 [shape = 'u32[]', space=smem, size = 0x4, offset = 0x4, fixed_abs, tag = 'smem constant byte address 0x4 - core index']
  #allocation1 [shape = 'u32[144,128]{1,0:T(1,128)}', space=vmem, size = 0x12000, scoped, tag = 'internal scratch']
  #allocation6 [shape = 's32[]', space=sflag, size = 0x4, offset = 0, fixed_abs, tag = 'sflag constant byte address 0x0 - dummy sync flag']
  %s0 = inlined_call_operand.hbm [shape: bf16[2,25,32,128], index: 0, kind: input, shape index: {}]
  %s1 = inlined_call_operand.hbm [shape: f32[2,2,6,16,128], index: 1, kind: output, shape index: {}]
  %s2 = sld [smem:[#allocation0]]
  $region45: #{tpu_custom_call.1} parent=0
    _
  %s4 = ssub.s32 1, %s2
  %s5 = scalar_select 0, %s4, %s2
  $region1: #{tpu_custom_call.1} parent=0
    #allocation2 [shape = 'u8[204800]{0}', space=vmem, size = 0x32000, scoped, tag = 'input window, operand 0']
    #allocation3 [shape = 's32[2]{0}', space=sflag, size = 0x8, scoped, tag = 'scoped memory for tpu_custom_call.1']
    #allocation4 [shape = 's32[2]{0}', space=sflag, size = 0x8, scoped, tag = 'scoped memory for tpu_custom_call.1']
    #allocation5 [shape = 'u8[98304]{0}', space=vmem, size = 0x18000, scoped, tag = 'output window, operand 0']
    %6 = vsyncpa [#allocation3], 0
    %s7 = scalar_lea.sflag [#allocation3], 1
    %8 = vsyncpa %s7, 0
    %9 = vsyncpa [#allocation4], 0
    %s10 = scalar_lea.sflag [#allocation4], 1
    %11 = vsyncpa %s10, 0
    loop: start=0, step=1, limit=6
    $region2: #{tpu_custom_call.1} parent=1 // loop_pre_header
      _
    $region3: #{tpu_custom_call.1} parent=1 // loop_header
      %s13 = sphi 0, %s17
      %p14 = scmp.ge.s32.totalorder %s13, 6
      %s20 = sphi 0, %s39
      %s21 = sphi 0, %s35
      %s22 = sphi 0, %s31
      %s23 = sphi 0, %s20
      %s24 = sphi 0, %s21
      %s25 = sphi 0, %s22
      %s26 = sphi 0, %s23
      %s27 = sphi 0, %s24
      %s28 = sphi 0, %s25
      %s46 = sphi 0, %s48
      %s49 = sphi 0, %s46
      %s50 = sphi 0, %s49
      %s66 = sphi 0, %s50
      %s74 = sphi 0, %s76
      %s77 = sphi 0, %s74
      %s78 = sphi 0, %s77
      %s94 = sphi 0, %s78
    $region4: #{tpu_custom_call.1} parent=1 // loop_header_branch
      %16 = sbr.rel (%p14) target = $region8
    $region5: #{tpu_custom_call.1} parent=1 // loop_body
      %s18 = ssub.s32 %s13, 1
      %s19 = ssub.s32 %s13, 2
      %s29 = sadd.s32 1, %s22
      %p30 = scmp.ge.s32.totalorder %s29, 1
      %s31 = scalar_select %p30, 0, %s29
      %s32 = sadd.s32 1, %s21
      %s33 = scalar_select %p30, %s32, %s21
      %p34 = scmp.ge.s32.totalorder %s33, 2
      %s35 = scalar_select %p34, 0, %s33
      %s36 = sadd.s32 1, %s20
      %s37 = scalar_select %p34, %s36, %s20
      %p38 = scmp.ge.s32.totalorder %s37, 2
      %s39 = scalar_select %p38, 0, %s37
      %s40 = sadd.s32 %s20, %s22
      %s41 = sadd.s32 %s39, %s31
      %s42 = ssub.s32 %s21, %s35
      %s43 = ssub.s32 %s40, %s41
      %s44 = sor.u32 %s42, %s43
      %p45 = scmp.eq.s32.totalorder %s44, 0
      %s47 = sadd.s32 %s46, 1
      %s48 = scalar_select %p45, %s46, %s47
      %p51 = pneg %p45
      %p52 = scmp.eq.s32.totalorder %s13, 3
      %p53 = por %p51, %p52
      %p54 = scmp.ne.s32.totalorder %s46, %s49
      %p55 = scmp.eq.s32.totalorder %s13, 0
      %p56 = por %p54, %p55
      %p57 = scmp.ne.s32.totalorder %s46, %s49
      %p58 = scmp.eq.s32.totalorder %s18, 3
      %p59 = por %p57, %p58
      %p60 = scmp.ne.s32.totalorder %s49, %s50
      %p61 = scmp.eq.s32.totalorder %s18, 0
      %p62 = por %p60, %p61
      %p63 = scmp.ne.s32.totalorder %s49, %s50
      %p64 = scmp.eq.s32.totalorder %s19, 3
      %p65 = por %p63, %p64
      %p67 = scmp.ne.s32.totalorder %s50, %s66
      %p68 = scmp.eq.s32.totalorder %s19, 0
      %p69 = por %p67, %p68
      %s70 = ssub.s32 %s20, %s39
      %s71 = ssub.s32 %s21, %s35
      %s72 = sor.u32 %s70, %s71
      %p73 = scmp.eq.s32.totalorder %s72, 0
      %s75 = sadd.s32 %s74, 1
      %s76 = scalar_select %p73, %s74, %s75
      %p79 = pneg %p73
      %p80 = scmp.eq.s32.totalorder %s13, 3
      %p81 = por %p79, %p80
      %p82 = scmp.ne.s32.totalorder %s74, %s77
      %p83 = scmp.eq.s32.totalorder %s13, 0
      %p84 = por %p82, %p83
      %p85 = scmp.ne.s32.totalorder %s74, %s77
      %p86 = scmp.eq.s32.totalorder %s18, 3
      %p87 = por %p85, %p86
      %p88 = scmp.ne.s32.totalorder %s77, %s78
      %p89 = scmp.eq.s32.totalorder %s18, 0
      %p90 = por %p88, %p89
      %p91 = scmp.ne.s32.totalorder %s77, %s78
      %p92 = scmp.eq.s32.totalorder %s19, 3
      %p93 = por %p91, %p92
      %p95 = scmp.ne.s32.totalorder %s78, %s94
      %p96 = scmp.eq.s32.totalorder %s19, 0
      %p97 = por %p95, %p96
      %p98 = scmp.le.s32.totalorder 1, %s13
      %p99 = scmp.lt.s32.totalorder %s13, 5
      %p100 = pnand %p98, %p99
      %p101 = pneg %p100
      // Predicated region
      $region9: #{tpu_custom_call.1} parent=5 // pred_check
        _
      $region10: #{tpu_custom_call.1} parent=5 // pred_check_branch
        %103 = sbr.rel (%p100) target = $region12
      $region11: #{tpu_custom_call.1} parent=5 // pred_region
        %s104 = ssub.s32 %s13, 1
      $region12: #{tpu_custom_call.1} parent=5 // pred_fallthru
        _
      %p105 = scmp.lt.s32.totalorder %s13, 4
      // Predicated region
      $region13: #{tpu_custom_call.1} parent=5 // pred_check
        %p106 = pneg %p105
      $region14: #{tpu_custom_call.1} parent=5 // pred_check_branch
        %108 = sbr.rel (%p106) target = $region16
      $region15: #{tpu_custom_call.1} parent=5 // pred_region
        // Predicated region
        $region17: #{tpu_custom_call.1} parent=15 // pred_check
          %p109 = pneg %p56
        $region18: #{tpu_custom_call.1} parent=15 // pred_check_branch
          %111 = sbr.rel (%p109) target = $region20
        $region19: #{tpu_custom_call.1} parent=15 // pred_region
          #allocation7 [shape = 'u32[6]{0}', space=smem, size = 0x18, scoped, tag = 'DMA stride descriptor']
          %s112 = sand.u32 %s46, 1
          %s113 = scalar_lea.sflag [#allocation3], %s112
          %s114 = sand.u32 %s46, 1
          %s115 = smul.addr %s114, 200
          %s116 = scalar_lea.vmem [#allocation2], %s115
          %s117 = sadd.s32 %s20, %s22
          %s118 = smul.u32 2, %s117
          %s120 = ssub.s32 3200, 3200
          %121 = vsyncadd %s113, %s120
          %s122 = smul.addr %s21, 100
          %s123 = sadd.s32 %s118, %s122
          %s124 = smul.addr %s123, 64
          %s125 = scalar_lea.hbm %s0, %s124
          %s127 = sshll.u32 1, 14
          %s128 = sxor.u32 4294967295, %s127
          %s130 = sld [smem:[#allocation0]]
          %s131 = sadd.s32 2, %s130
          %s133 = sshll.u32 7, 26
          %s134 = sxor.u32 4294967295, %s133
          %s135 = sand.u32 0, %s134
          %s136 = sshll.u32 %s131, 26
          %s137 = sor.u32 %s135, %s136
          %s138 = sshll.u32 %s116, 4
          %s139 = int_to_ptr.vmem [resolvable:$true] %s138
          %145 = sst [smem:[#allocation7]] 256
          %s146 = scalar_lea.smem [#allocation7], 1
          %147 = sst [smem:[%s146]] 128
          %s148 = scalar_lea.smem [#allocation7], 2
          %149 = sst [smem:[%s148]] 2
          %s150 = scalar_lea.smem [#allocation7], 3
          %151 = sst [smem:[%s150]] 64
          %s152 = scalar_lea.smem [#allocation7], 4
          %153 = sst [smem:[%s152]] 64
          %s154 = scalar_lea.smem [#allocation7], 5
          %155 = sst [smem:[%s154]] 4
          %157 = dma.general %s125, 3200, %s139, %s113, [#allocation6], [#allocation7], %s137, 0
        $region20: #{tpu_custom_call.1} parent=15 // pred_fallthru
          _
      $region16: #{tpu_custom_call.1} parent=5 // pred_fallthru
        _
      %p158 = scmp.le.s32.totalorder 1, %s13
      %p159 = scmp.lt.s32.totalorder %s13, 5
      %p160 = pnand %p158, %p159
      %p161 = pneg %p160
      // Predicated region
      $region21: #{tpu_custom_call.1} parent=5 // pred_check
        _
      $region22: #{tpu_custom_call.1} parent=5 // pred_check_branch
        %163 = sbr.rel (%p160) target = $region24
      $region23: #{tpu_custom_call.1} parent=5 // pred_region
        %s164 = ssub.s32 %s13, 1
        %s165 = sand.u32 %s49, 1
        %s166 = scalar_lea.sflag [#allocation3], %s165
        %s167 = sand.u32 %s49, 1
        %s168 = smul.addr %s167, 200
        %s169 = scalar_lea.vmem [#allocation2], %s168
        // Predicated region
        $region25: #{tpu_custom_call.1} parent=23 // pred_check
          %p170 = pneg %p62
        $region26: #{tpu_custom_call.1} parent=23 // pred_check_branch
          %172 = sbr.rel (%p170) target = $region28
        $region27: #{tpu_custom_call.1} parent=23 // pred_region
          %173 = dma.done %s166, 3200
        $region28: #{tpu_custom_call.1} parent=23 // pred_fallthru
          _
        %s174 = sand.u32 %s49, 1
        %s175 = scalar_lea.sflag [#allocation3], %s174
        %s176 = sand.u32 %s49, 1
        %s177 = smul.addr %s176, 200
        %s178 = scalar_lea.vmem [#allocation2], %s177
        %p179 = pneg %p62
        %p180 = pneg %p59
        %p181 = pneg %p90
        %p182 = pneg %p87
        %s183 = sand.u32 %s77, 1
        %s184 = scalar_lea.sflag [#allocation4], %s183
        %s185 = sand.u32 %s77, 1
        %s186 = smul.addr %s185, 96
        %s187 = scalar_lea.vmem [#allocation5], %s186
        %s188 = sadd.s32 %s23, %s25
        %s189 = smul.u32 2, %s188
        %p190 = scmp.eq.s32.totalorder %s25, 0
        // Predicated region
        $region29: #{tpu_custom_call.1} parent=23 // pred_check
          %p191 = pneg %p190
        $region30: #{tpu_custom_call.1} parent=23 // pred_check_branch
          %193 = sbr.rel (%p191) target = $region32
        $region31: #{tpu_custom_call.1} parent=23 // pred_region
          %194 = vst [vmem:[%s187] sm:$0xff] 0.0
          %195 = vst [vmem:[%s187 + $0x8] sm:$0xff] 0.0
          %196 = vst [vmem:[%s187 + $0x10] sm:$0xff] 0.0
          %197 = vst [vmem:[%s187 + $0x18] sm:$0xff] 0.0
          %198 = vst [vmem:[%s187 + $0x20] sm:$0xff] 0.0
          %199 = vst [vmem:[%s187 + $0x28] sm:$0xff] 0.0
          %200 = vst [vmem:[%s187 + $0x30] sm:$0xff] 0.0
          %201 = vst [vmem:[%s187 + $0x38] sm:$0xff] 0.0
          %202 = vst [vmem:[%s187 + $0x40] sm:$0xff] 0.0
          %203 = vst [vmem:[%s187 + $0x48] sm:$0xff] 0.0
          %204 = vst [vmem:[%s187 + $0x50] sm:$0xff] 0.0
          %205 = vst [vmem:[%s187 + $0x58] sm:$0xff] 0.0
        $region32: #{tpu_custom_call.1} parent=23 // pred_fallthru
          _
        %s206 = scalar_lea.vmem %s169, 8 [#allocation2]
        %v207 = vld [vmem:[%s206] sm:$0xf]
        %v208 = vld [vmem:[%s206 + $0x4] sm:$0xf]
        %v209 = vunpack.c.l.bf16 %v207
        %v210 = vunpack.c.l.bf16 %v208
        %v211 = vld [vmem:[%s169] sm:$0xf]
        %v212 = vld [vmem:[%s169 + $0x4] sm:$0xf]
        %v213 = vunpack.c.l.bf16 %v211
        %v214 = vunpack.c.l.bf16 %v212
        %vm215 = vcmp.eq.f32.partialorder %v209, 0.0
        %vm216 = vcmp.eq.f32.partialorder %v210, 0.0
        %v217 = vsel %vm215, 1, 0
        %v218 = vsel %vm216, 1, 0
        %v219 = vcvt.s32.f32 %v217
        %v220 = vcvt.s32.f32 %v218
        %vm221 = vcmp.gt.f32.partialorder %v213, -8192.0
        %vm222 = vcmp.gt.f32.partialorder %v214, -8192.0
        %v223 = vsel %vm221, 1, 0
        %v224 = vsel %vm222, 1, 0
        %v225 = vcvt.s32.f32 %v223
        %v226 = vcvt.s32.f32 %v224
        %v227 = vand.u32 2147483647, %v213
        %v228 = vand.u32 2147483647, %v214
        %v229 = vsub.f32 0.0, %v227
        %v230 = vsub.f32 0.0, %v228
        %v231 = vmul.f32 %v229, 1.442695
        %v232 = vpow.pop %v231
        %v233 = vmul.f32 %v230, 1.442695
        %v234 = vpow.pop %v233
        %v235 = vmax.f32 %v213, 0.0
        %v236 = vmax.f32 %v214, 0.0
        %v237 = vmul.f32 %v213, %v219
        %v238 = vmul.f32 %v214, %v220
        %v239 = vsub.f32 %v235, %v237
        %v240 = vsub.f32 %v236, %v238
        %v241 = vadd.f32 %v232, 1.0
        %v242 = vlog2.pop %v241
        %v243 = vmul.f32 %v242, 0.6931472
        %v244 = vmul.f32 -0.5, %v232
        %v245 = vadd.f32 %v244, 1.0
        %v246 = vmul.f32 %v245, %v232
        %v247 = vand.u32 2147483647, %v232
        %vm248 = vcmp.lt.f32.partialorder %v247, 0.0004427343
        %v249 = vsel %vm248, %v246, %v243
        %v250 = vadd.f32 %v234, 1.0
        %v251 = vlog2.pop %v250
        %v252 = vmul.f32 %v251, 0.6931472
        %v253 = vmul.f32 -0.5, %v234
        %v254 = vadd.f32 %v253, 1.0
        %v255 = vmul.f32 %v254, %v234
        %v256 = vand.u32 2147483647, %v234
        %vm257 = vcmp.lt.f32.partialorder %v256, 0.0004427343
        %v258 = vsel %vm257, %v255, %v252
        %v259 = vadd.f32 %v239, %v249
        %v260 = vadd.f32 %v240, %v258
        %v261 = vadd.f32 %v232, 1.0
        %v262 = vadd.f32 %v234, 1.0
        %v263 = vrcp.pop %v261
        %v264 = vrcp.pop %v262
        %vm265 = vcmp.ge.f32.partialorder %v213, 0.0
        %vm266 = vcmp.ge.f32.partialorder %v214, 0.0
        %v267 = vmul.f32 %v232, %v263
        %v268 = vmul.f32 %v234, %v264
        %v269 = vsel %vm265, %v263, %v267
        %v270 = vsel %vm266, %v264, %v268
        %v271 = vsub.f32 1.0, %v269
        %v272 = vsub.f32 1.0, %v270
        %v273 = vmul.f32 %v271, %v219
        %v274 = vmul.f32 %v272, %v220
        %v275 = vsub.f32 1.0, %v219
        %v276 = vsub.f32 1.0, %v220
        %v277 = vmul.f32 %v269, %v275
        %v278 = vmul.f32 %v270, %v276
        %v279 = vadd.f32 %v273, %v277
        %v280 = vadd.f32 %v274, %v278
        %v281 = vmul.f32 %v279, %v279
        %v282 = vmul.f32 %v280, %v280
        %v283 = vmul.f32 %v219, 0.25
        %v284 = vmul.f32 %v220, 0.25
        %v285 = vmul.f32 %v275, 0.75
        %v286 = vmul.f32 %v276, 0.75
        %v287 = vadd.f32 %v283, %v285
        %v288 = vadd.f32 %v284, %v286
        %v289 = vmul.f32 %v287, %v281
        %v290 = vmul.f32 %v288, %v282
        %v291 = vmul.f32 %v259, %v289
        %v292 = vmul.f32 %v260, %v290
        %v293 = vmul.f32 %v291, %v225
        %v294 = vmul.f32 %v292, %v226
        %v295 = vadd.f32 %v293, 0.0
        %v296 = vadd.f32 %v294, 0.0
        %v297 = vadd.f32 %v295, 0.0
        %v298 = vadd.f32 %v296, 0.0
        %s299 = scalar_lea.vmem %s169, 16 [#allocation2]
        %v300 = vld [vmem:[%s299] sm:$0xf]
        %v301 = vld [vmem:[%s299 + $0x4] sm:$0xf]
        %v302 = vunpack.c.l.bf16 %v300
        %v303 = vunpack.c.l.bf16 %v301
        %s304 = scalar_lea.vmem %s169, 72 [#allocation2]
        %v305 = vld [vmem:[%s304] sm:$0xf]
        %v306 = vld [vmem:[%s304 + $0x4] sm:$0xf]
        %v307 = vunpack.c.l.bf16 %v305
        %v308 = vunpack.c.l.bf16 %v306
        %s309 = scalar_lea.vmem %s169, 128 [#allocation2]
        %v310 = vld [vmem:[%s309] sm:$0xf]
        %v311 = vld [vmem:[%s309 + $0x4] sm:$0xf]
        %v312 = vunpack.c.l.bf16 %v310
        %v313 = vunpack.c.l.bf16 %v311
        %vm314 = vcmp.ne.f32.partialorder %v307, 0.0
        %vm315 = vcmp.ne.f32.partialorder %v308, 0.0
        %v316 = vsel %vm314, 1, 0
        %v317 = vsel %vm315, 1, 0
        %v318 = vcvt.s32.f32 %v316
        %v319 = vcvt.s32.f32 %v317
        %v320 = vmax.f32 %v318, 0.0
        %v321 = vmax.f32 %v319, 0.0
        %vm322 = vcmp.ne.f32.partialorder %v302, 0.0
        %vm323 = vcmp.ne.f32.partialorder %v303, 0.0
        %v324 = vsel %vm322, 1, 0
        %v325 = vsel %vm323, 1, 0
        %v326 = vcvt.s32.f32 %v324
        %v327 = vcvt.s32.f32 %v325
        %v328 = vmax.f32 %v326, 0.0
        %v329 = vmax.f32 %v327, 0.0
        %vm330 = vcmp.ne.f32.partialorder %v307, %v307
        %vm331 = vcmp.ne.f32.partialorder %v308, %v308
        %v332 = vsel %vm330, 0.0, %v307
        %v333 = vsel %vm331, 0.0, %v308
        %v334 = vsub.f32 %v302, %v332
        %v335 = vsub.f32 %v303, %v333
        %v336 = vand.u32 2147483647, %v334
        %v337 = vand.u32 2147483647, %v335
        %v338 = vmul.f32 %v336, %v312
        %v339 = vmul.f32 %v337, %v313
        %v340 = vadd.f32 %v338, 0.0
        %v341 = vadd.f32 %v339, 0.0
        %s342 = scalar_lea.vmem %s169, 24 [#allocation2]
        %v343 = vld [vmem:[%s342] sm:$0xf]
        %v344 = vld [vmem:[%s342 + $0x4] sm:$0xf]
        %v345 = vunpack.c.l.bf16 %v343
        %v346 = vunpack.c.l.bf16 %v344
        %s347 = scalar_lea.vmem %s169, 80 [#allocation2]
        %v348 = vld [vmem:[%s347] sm:$0xf]
        %v349 = vld [vmem:[%s347 + $0x4] sm:$0xf]
        %v350 = vunpack.c.l.bf16 %v348
        %v351 = vunpack.c.l.bf16 %v349
        %s352 = scalar_lea.vmem %s169, 136 [#allocation2]
        %v353 = vld [vmem:[%s352] sm:$0xf]
        %v354 = vld [vmem:[%s352 + $0x4] sm:$0xf]
        %v355 = vunpack.c.l.bf16 %v353
        %v356 = vunpack.c.l.bf16 %v354
        %vm357 = vcmp.ne.f32.partialorder %v350, 0.0
        %vm358 = vcmp.ne.f32.partialorder %v351, 0.0
        %v359 = vsel %vm357, 1, 0
        %v360 = vsel %vm358, 1, 0
        %v361 = vcvt.s32.f32 %v359
        %v362 = vcvt.s32.f32 %v360
        %v363 = vmax.f32 %v320, %v361
        %v364 = vmax.f32 %v321, %v362
        %vm365 = vcmp.ne.f32.partialorder %v345, 0.0
        %vm366 = vcmp.ne.f32.partialorder %v346, 0.0
        %v367 = vsel %vm365, 1, 0
        %v368 = vsel %vm366, 1, 0
        %v369 = vcvt.s32.f32 %v367
        %v370 = vcvt.s32.f32 %v368
        %v371 = vmax.f32 %v328, %v369
        %v372 = vmax.f32 %v329, %v370
        %vm373 = vcmp.ne.f32.partialorder %v350, %v350
        %vm374 = vcmp.ne.f32.partialorder %v351, %v351
        %v375 = vsel %vm373, 0.0, %v350
        %v376 = vsel %vm374, 0.0, %v351
        %v377 = vsub.f32 %v345, %v375
        %v378 = vsub.f32 %v346, %v376
        %v379 = vand.u32 2147483647, %v377
        %v380 = vand.u32 2147483647, %v378
        %v381 = vmul.f32 %v379, %v355
        %v382 = vmul.f32 %v380, %v356
        %v383 = vadd.f32 %v340, %v381
        %v384 = vadd.f32 %v341, %v382
        %s385 = scalar_lea.vmem %s169, 32 [#allocation2]
        %v386 = vld [vmem:[%s385] sm:$0xf]
        %v387 = vld [vmem:[%s385 + $0x4] sm:$0xf]
        %v388 = vunpack.c.l.bf16 %v386
        %v389 = vunpack.c.l.bf16 %v387
        %s390 = scalar_lea.vmem %s169, 88 [#allocation2]
        %v391 = vld [vmem:[%s390] sm:$0xf]
        %v392 = vld [vmem:[%s390 + $0x4] sm:$0xf]
        %v393 = vunpack.c.l.bf16 %v391
        %v394 = vunpack.c.l.bf16 %v392
        %s395 = scalar_lea.vmem %s169, 144 [#allocation2]
        %v396 = vld [vmem:[%s395] sm:$0xf]
        %v397 = vld [vmem:[%s395 + $0x4] sm:$0xf]
        %v398 = vunpack.c.l.bf16 %v396
        %v399 = vunpack.c.l.bf16 %v397
        %vm400 = vcmp.ne.f32.partialorder %v393, 0.0
        %vm401 = vcmp.ne.f32.partialorder %v394, 0.0
        %v402 = vsel %vm400, 1, 0
        %v403 = vsel %vm401, 1, 0
        %v404 = vcvt.s32.f32 %v402
        %v405 = vcvt.s32.f32 %v403
        %v406 = vmax.f32 %v363, %v404
        %v407 = vmax.f32 %v364, %v405
        %vm408 = vcmp.ne.f32.partialorder %v388, 0.0
        %vm409 = vcmp.ne.f32.partialorder %v389, 0.0
        %v410 = vsel %vm408, 1, 0
        %v411 = vsel %vm409, 1, 0
        %v412 = vcvt.s32.f32 %v410
        %v413 = vcvt.s32.f32 %v411
        %v414 = vmax.f32 %v371, %v412
        %v415 = vmax.f32 %v372, %v413
        %vm416 = vcmp.ne.f32.partialorder %v393, %v393
        %vm417 = vcmp.ne.f32.partialorder %v394, %v394
        %v418 = vsel %vm416, 0.0, %v393
        %v419 = vsel %vm417, 0.0, %v394
        %v420 = vsub.f32 %v388, %v418
        %v421 = vsub.f32 %v389, %v419
        %v422 = vand.u32 2147483647, %v420
        %v423 = vand.u32 2147483647, %v421
        %v424 = vmul.f32 %v422, %v398
        %v425 = vmul.f32 %v423, %v399
        %v426 = vadd.f32 %v383, %v424
        %v427 = vadd.f32 %v384, %v425
        %s428 = scalar_lea.vmem %s169, 40 [#allocation2]
        %v429 = vld [vmem:[%s428] sm:$0xf]
        %v430 = vld [vmem:[%s428 + $0x4] sm:$0xf]
        %v431 = vunpack.c.l.bf16 %v429
        %v432 = vunpack.c.l.bf16 %v430
        %s433 = scalar_lea.vmem %s169, 96 [#allocation2]
        %v434 = vld [vmem:[%s433] sm:$0xf]
        %v435 = vld [vmem:[%s433 + $0x4] sm:$0xf]
        %v436 = vunpack.c.l.bf16 %v434
        %v437 = vunpack.c.l.bf16 %v435
        %s438 = scalar_lea.vmem %s169, 152 [#allocation2]
        %v439 = vld [vmem:[%s438] sm:$0xf]
        %v440 = vld [vmem:[%s438 + $0x4] sm:$0xf]
        %v441 = vunpack.c.l.bf16 %v439
        %v442 = vunpack.c.l.bf16 %v440
        %vm443 = vcmp.ne.f32.partialorder %v436, 0.0
        %vm444 = vcmp.ne.f32.partialorder %v437, 0.0
        %v445 = vsel %vm443, 1, 0
        %v446 = vsel %vm444, 1, 0
        %v447 = vcvt.s32.f32 %v445
        %v448 = vcvt.s32.f32 %v446
        %v449 = vmax.f32 %v406, %v447
        %v450 = vmax.f32 %v407, %v448
        %vm451 = vcmp.ne.f32.partialorder %v431, 0.0
        %vm452 = vcmp.ne.f32.partialorder %v432, 0.0
        %v453 = vsel %vm451, 1, 0
        %v454 = vsel %vm452, 1, 0
        %v455 = vcvt.s32.f32 %v453
        %v456 = vcvt.s32.f32 %v454
        %v457 = vmax.f32 %v414, %v455
        %v458 = vmax.f32 %v415, %v456
        %vm459 = vcmp.ne.f32.partialorder %v436, %v436
        %vm460 = vcmp.ne.f32.partialorder %v437, %v437
        %v461 = vsel %vm459, 0.0, %v436
        %v462 = vsel %vm460, 0.0, %v437
        %v463 = vsub.f32 %v431, %v461
        %v464 = vsub.f32 %v432, %v462
        %v465 = vand.u32 2147483647, %v463
        %v466 = vand.u32 2147483647, %v464
        %v467 = vmul.f32 %v465, %v441
        %v468 = vmul.f32 %v466, %v442
        %v469 = vadd.f32 %v426, %v467
        %v470 = vadd.f32 %v427, %v468
        %s471 = scalar_lea.vmem %s169, 48 [#allocation2]
        %v472 = vld [vmem:[%s471] sm:$0xf]
        %v473 = vld [vmem:[%s471 + $0x4] sm:$0xf]
        %v474 = vunpack.c.l.bf16 %v472
        %v475 = vunpack.c.l.bf16 %v473
        %s476 = scalar_lea.vmem %s169, 104 [#allocation2]
        %v477 = vld [vmem:[%s476] sm:$0xf]
        %v478 = vld [vmem:[%s476 + $0x4] sm:$0xf]
        %v479 = vunpack.c.l.bf16 %v477
        %v480 = vunpack.c.l.bf16 %v478
        %s481 = scalar_lea.vmem %s169, 160 [#allocation2]
        %v482 = vld [vmem:[%s481] sm:$0xf]
        %v483 = vld [vmem:[%s481 + $0x4] sm:$0xf]
        %v484 = vunpack.c.l.bf16 %v482
        %v485 = vunpack.c.l.bf16 %v483
        %vm486 = vcmp.ne.f32.partialorder %v479, 0.0
        %vm487 = vcmp.ne.f32.partialorder %v480, 0.0
        %v488 = vsel %vm486, 1, 0
        %v489 = vsel %vm487, 1, 0
        %v490 = vcvt.s32.f32 %v488
        %v491 = vcvt.s32.f32 %v489
        %v492 = vmax.f32 %v449, %v490
        %v493 = vmax.f32 %v450, %v491
        %vm494 = vcmp.ne.f32.partialorder %v474, 0.0
        %vm495 = vcmp.ne.f32.partialorder %v475, 0.0
        %v496 = vsel %vm494, 1, 0
        %v497 = vsel %vm495, 1, 0
        %v498 = vcvt.s32.f32 %v496
        %v499 = vcvt.s32.f32 %v497
        %v500 = vmax.f32 %v457, %v498
        %v501 = vmax.f32 %v458, %v499
        %vm502 = vcmp.ne.f32.partialorder %v479, %v479
        %vm503 = vcmp.ne.f32.partialorder %v480, %v480
        %v504 = vsel %vm502, 0.0, %v479
        %v505 = vsel %vm503, 0.0, %v480
        %v506 = vsub.f32 %v474, %v504
        %v507 = vsub.f32 %v475, %v505
        %v508 = vand.u32 2147483647, %v506
        %v509 = vand.u32 2147483647, %v507
        %v510 = vmul.f32 %v508, %v484
        %v511 = vmul.f32 %v509, %v485
        %v512 = vadd.f32 %v469, %v510
        %v513 = vadd.f32 %v470, %v511
        %s514 = scalar_lea.vmem %s169, 56 [#allocation2]
        %v515 = vld [vmem:[%s514] sm:$0xf]
        %v516 = vld [vmem:[%s514 + $0x4] sm:$0xf]
        %v517 = vunpack.c.l.bf16 %v515
        %v518 = vunpack.c.l.bf16 %v516
        %s519 = scalar_lea.vmem %s169, 112 [#allocation2]
        %v520 = vld [vmem:[%s519] sm:$0xf]
        %v521 = vld [vmem:[%s519 + $0x4] sm:$0xf]
        %v522 = vunpack.c.l.bf16 %v520
        %v523 = vunpack.c.l.bf16 %v521
        %s524 = scalar_lea.vmem %s169, 168 [#allocation2]
        %v525 = vld [vmem:[%s524] sm:$0xf]
        %v526 = vld [vmem:[%s524 + $0x4] sm:$0xf]
        %v527 = vunpack.c.l.bf16 %v525
        %v528 = vunpack.c.l.bf16 %v526
        %vm529 = vcmp.ne.f32.partialorder %v522, 0.0
        %vm530 = vcmp.ne.f32.partialorder %v523, 0.0
        %v531 = vsel %vm529, 1, 0
        %v532 = vsel %vm530, 1, 0
        %v533 = vcvt.s32.f32 %v531
        %v534 = vcvt.s32.f32 %v532
        %v535 = vmax.f32 %v492, %v533
        %v536 = vmax.f32 %v493, %v534
        %vm537 = vcmp.ne.f32.partialorder %v517, 0.0
        %vm538 = vcmp.ne.f32.partialorder %v518, 0.0
        %v539 = vsel %vm537, 1, 0
        %v540 = vsel %vm538, 1, 0
        %v541 = vcvt.s32.f32 %v539
        %v542 = vcvt.s32.f32 %v540
        %v543 = vmax.f32 %v500, %v541
        %v544 = vmax.f32 %v501, %v542
        %vm545 = vcmp.ne.f32.partialorder %v522, %v522
        %vm546 = vcmp.ne.f32.partialorder %v523, %v523
        %v547 = vsel %vm545, 0.0, %v522
        %v548 = vsel %vm546, 0.0, %v523
        %v549 = vsub.f32 %v517, %v547
        %v550 = vsub.f32 %v518, %v548
        %v551 = vand.u32 2147483647, %v549
        %v552 = vand.u32 2147483647, %v550
        %v553 = vmul.f32 %v551, %v527
        %v554 = vmul.f32 %v552, %v528
        %v555 = vadd.f32 %v512, %v553
        %v556 = vadd.f32 %v513, %v554
        %s557 = scalar_lea.vmem %s169, 64 [#allocation2]
        %v558 = vld [vmem:[%s557] sm:$0xf]
        %v559 = vld [vmem:[%s557 + $0x4] sm:$0xf]
        %v560 = vunpack.c.l.bf16 %v558
        %v561 = vunpack.c.l.bf16 %v559
        %s562 = scalar_lea.vmem %s169, 120 [#allocation2]
        %v563 = vld [vmem:[%s562] sm:$0xf]
        %v564 = vld [vmem:[%s562 + $0x4] sm:$0xf]
        %v565 = vunpack.c.l.bf16 %v563
        %v566 = vunpack.c.l.bf16 %v564
        %s567 = scalar_lea.vmem %s169, 176 [#allocation2]
        %v568 = vld [vmem:[%s567] sm:$0xf]
        %v569 = vld [vmem:[%s567 + $0x4] sm:$0xf]
        %v570 = vunpack.c.l.bf16 %v568
        %v571 = vunpack.c.l.bf16 %v569
        %vm572 = vcmp.ne.f32.partialorder %v565, 0.0
        %vm573 = vcmp.ne.f32.partialorder %v566, 0.0
        %v574 = vsel %vm572, 1, 0
        %v575 = vsel %vm573, 1, 0
        %v576 = vcvt.s32.f32 %v574
        %v577 = vcvt.s32.f32 %v575
        %v578 = vmax.f32 %v535, %v576
        %v579 = vmax.f32 %v536, %v577
        %vm580 = vcmp.ne.f32.partialorder %v560, 0.0
        %vm581 = vcmp.ne.f32.partialorder %v561, 0.0
        %v582 = vsel %vm580, 1, 0
        %v583 = vsel %vm581, 1, 0
        %v584 = vcvt.s32.f32 %v582
        %v585 = vcvt.s32.f32 %v583
        %v586 = vmax.f32 %v543, %v584
        %v587 = vmax.f32 %v544, %v585
        %vm588 = vcmp.ne.f32.partialorder %v565, %v565
        %vm589 = vcmp.ne.f32.partialorder %v566, %v566
        %v590 = vsel %vm588, 0.0, %v565
        %v591 = vsel %vm589, 0.0, %v566
        %v592 = vsub.f32 %v560, %v590
        %v593 = vsub.f32 %v561, %v591
        %v594 = vand.u32 2147483647, %v592
        %vm595 = vcmp.le.f32.partialorder %v594, 0.7853982
        %vm596 = vcmp.lt.s32.totalorder %v592, 0
        %v597 = vand.u32 %v592, 2139095040
        %v598 = vshrl.u32 %v597, 23
        %v599 = vsub.s32 %v598, 127
        %v600 = vand.u32 2147483647, %v592
        %v601 = vand.u32 %v600, 8388607
        %v602 = vor.u32 %v601, 8388608
        %v603 = vsub.s32 0, %v602
        %v604 = vadd.s32 %v599, 1
        %vm605 = vcmp.gt.s32.totalorder %v604, 0
        %v606 = vsel %vm605, %v604, 0
        %v607 = vshrl.u32 %v606, 5
        %v608 = vand.u32 %v606, 31
        %v609 = vsub.s32 32, %v608
        %v610 = vshrl.u32 683565275, %v609
        %v611 = vshll.u32 683565275, %v608
        %v612 = vshrl.u32 2475754826, %v609
        %v613 = vor.u32 %v611, %v612
        %v614 = vshll.u32 2475754826, %v608
        %v615 = vshrl.u32 2131351028, %v609
        %v616 = vor.u32 %v614, %v615
        %v617 = vshll.u32 2131351028, %v608
        %v618 = vshrl.u32 2102212464, %v609
        %v619 = vor.u32 %v617, %v618
        %v620 = vshll.u32 2102212464, %v608
        %v621 = vshrl.u32 920167782, %v609
        %v622 = vor.u32 %v620, %v621
        %v623 = vshll.u32 920167782, %v608
        %v624 = vshrl.u32 1326507024, %v609
        %v625 = vor.u32 %v623, %v624
        %vm626 = vcmp.lt.s32.totalorder %v607, 1
        %vm627 = vcmp.lt.s32.totalorder %v607, 2
        %vm628 = vcmp.lt.s32.totalorder %v607, 3
        %vm629 = vcmp.lt.s32.totalorder %v607, 4
        %v630 = vsel %vm626, %v610, %v613
        %v631 = vsel %vm629, %v619, 2102212464
        %v632 = vsel %vm628, %v616, %v631
        %v633 = vsel %vm627, %v630, %v632
        %v634 = vsel %vm626, %v613, %v616
        %v635 = vsel %vm629, %v622, 920167782
        %v636 = vsel %vm628, %v619, %v635
        %v637 = vsel %vm627, %v634, %v636
        %v638 = vsel %vm626, %v616, %v619
        %v639 = vsel %vm629, %v625, 1326507024
        %v640 = vsel %vm628, %v622, %v639
        %v641 = vsel %vm627, %v638, %v640
        %v642 = vshll.u32 %v602, 8
        %v643 = vmul.u32.u64.compose %v642, %v641
        %v644 = vextract.low.u32 %v643
        %v645 = vextract.high.u32 %v643
        %v646 = vmul.u32.u64.compose %v642, %v637
        %v647 = vextract.low.u32 %v646
        %v648 = vextract.high.u32 %v646
        %v649 = vmul.u32 %v642, %v633
        %v650 = vadd.s32 %v645, %v647
        %vm651 = vc.u32 %v645, %v647
        %v652 = vadd.s32 %v648, 1
        %v653 = vsel %vm651, %v652, %v648
        %v654 = vadd.s32 %v649, %v653
        %v655 = vadd.s32 %v654, 536870912
        %v656 = vshrl.u32 %v655, 30
        %v657 = vshll.u32 %v656, 30
        %v658 = vsub.s32 %v654, %v657
        %vm659 = vcmp.lt.s32.totalorder %v658, 0
        %v660 = vsub.s32 0, %v658
        %v661 = vsel %vm659, %v660, %v658
        %v662 = vclz %v661
        %v663 = vsub.s32 %v662, 2
        %vm664 = vcmp.gt.s32.totalorder 0, %v663
        %v665 = vsel %vm664, 0, %v663
        %v666 = vsub.s32 32, %v665
        %v667 = vshll.u32 %v658, %v665
        %v668 = vshrl.u32 %v650, %v666
        %v669 = vor.u32 %v667, %v668
        %v670 = vsub.s32 4294967266, %v665
        %v671 = vadd.s32 %v670, 127
        %v672 = vshll.u32 %v671, 23
        %v673 = vor.u32 4788187, %v672
        %v674 = vand.u32 2147483647, %v673
        %v676 = vcvt.s32.f32 %v669
        %v677 = vmul.f32 %v676, %v674
        %v678 = vxor.u32 %v677, 2147483648
        %v679 = vsel %vm596, %v678, %v677
        %v680 = vsub.s32 4, %v656
        %v681 = vsel %vm596, %v680, %v656
        %v682 = vsel %vm595, %v592, %v679
        %v683 = vsel %vm595, 0, %v681
        %v684 = vcosq.f32.pop %v682
        %v685 = vsinq.f32.pop %v682
        %vm686 = vweird.f32 %v592
        %v687 = vadd.s32 %v683, 3
        %v688 = vand.u32 %v687, 3
        %vm689 = vcmp.lt.s32.totalorder %v688, 2
        %vm690 = vcmp.eq.s32.totalorder %v688, 0
        %v691 = vxor.u32 %v685, 2147483648
        %v692 = vsel %vm690, %v684, %v691
        %vm693 = vcmp.eq.s32.totalorder %v688, 2
        %v694 = vxor.u32 %v684, 2147483648
        %v695 = vsel %vm693, %v694, %v685
        %v696 = vsel %vm689, %v692, %v695
        %v697 = vsel %vm686, nan, %v696
        %v698 = vand.u32 2147483647, %v593
        %vm699 = vcmp.le.f32.partialorder %v698, 0.7853982
        %vm700 = vcmp.lt.s32.totalorder %v593, 0
        %v701 = vand.u32 %v593, 2139095040
        %v702 = vshrl.u32 %v701, 23
        %v703 = vsub.s32 %v702, 127
        %v704 = vand.u32 2147483647, %v593
        %v705 = vand.u32 %v704, 8388607
        %v706 = vor.u32 %v705, 8388608
        %v707 = vsub.s32 0, %v706
        %v708 = vadd.s32 %v703, 1
        %vm709 = vcmp.gt.s32.totalorder %v708, 0
        %v710 = vsel %vm709, %v708, 0
        %v711 = vshrl.u32 %v710, 5
        %v712 = vand.u32 %v710, 31
        %v713 = vsub.s32 32, %v712
        %v714 = vshrl.u32 683565275, %v713
        %v715 = vshll.u32 683565275, %v712
        %v716 = vshrl.u32 2475754826, %v713
        %v717 = vor.u32 %v715, %v716
        %v718 = vshll.u32 2475754826, %v712
        %v719 = vshrl.u32 2131351028, %v713
        %v720 = vor.u32 %v718, %v719
        %v721 = vshll.u32 2131351028, %v712
        %v722 = vshrl.u32 2102212464, %v713
        %v723 = vor.u32 %v721, %v722
        %v724 = vshll.u32 2102212464, %v712
        %v725 = vshrl.u32 920167782, %v713
        %v726 = vor.u32 %v724, %v725
        %v727 = vshll.u32 920167782, %v712
        %v728 = vshrl.u32 1326507024, %v713
        %v729 = vor.u32 %v727, %v728
        %vm730 = vcmp.lt.s32.totalorder %v711, 1
        %vm731 = vcmp.lt.s32.totalorder %v711, 2
        %vm732 = vcmp.lt.s32.totalorder %v711, 3
        %vm733 = vcmp.lt.s32.totalorder %v711, 4
        %v734 = vsel %vm730, %v714, %v717
        %v735 = vsel %vm733, %v723, 2102212464
        %v736 = vsel %vm732, %v720, %v735
        %v737 = vsel %vm731, %v734, %v736
        %v738 = vsel %vm730, %v717, %v720
        %v739 = vsel %vm733, %v726, 920167782
        %v740 = vsel %vm732, %v723, %v739
        %v741 = vsel %vm731, %v738, %v740
        %v742 = vsel %vm730, %v720, %v723
        %v743 = vsel %vm733, %v729, 1326507024
        %v744 = vsel %vm732, %v726, %v743
        %v745 = vsel %vm731, %v742, %v744
        %v746 = vshll.u32 %v706, 8
        %v747 = vmul.u32.u64.compose %v746, %v745
        %v748 = vextract.low.u32 %v747
        %v749 = vextract.high.u32 %v747
        %v750 = vmul.u32.u64.compose %v746, %v741
        %v751 = vextract.low.u32 %v750
        %v752 = vextract.high.u32 %v750
        %v753 = vmul.u32 %v746, %v737
        %v754 = vadd.s32 %v749, %v751
        %vm755 = vc.u32 %v749, %v751
        %v756 = vadd.s32 %v752, 1
        %v757 = vsel %vm755, %v756, %v752
        %v758 = vadd.s32 %v753, %v757
        %v759 = vadd.s32 %v758, 536870912
        %v760 = vshrl.u32 %v759, 30
        %v761 = vshll.u32 %v760, 30
        %v762 = vsub.s32 %v758, %v761
        %vm763 = vcmp.lt.s32.totalorder %v762, 0
        %v764 = vsub.s32 0, %v762
        %v765 = vsel %vm763, %v764, %v762
        %v766 = vclz %v765
        %v767 = vsub.s32 %v766, 2
        %vm768 = vcmp.gt.s32.totalorder 0, %v767
        %v769 = vsel %vm768, 0, %v767
        %v770 = vsub.s32 32, %v769
        %v771 = vshll.u32 %v762, %v769
        %v772 = vshrl.u32 %v754, %v770
        %v773 = vor.u32 %v771, %v772
        %v774 = vsub.s32 4294967266, %v769
        %v775 = vadd.s32 %v774, 127
        %v776 = vshll.u32 %v775, 23
        %v777 = vor.u32 4788187, %v776
        %v778 = vand.u32 2147483647, %v777
        %v780 = vcvt.s32.f32 %v773
        %v781 = vmul.f32 %v780, %v778
        %v782 = vxor.u32 %v781, 2147483648
        %v783 = vsel %vm700, %v782, %v781
        %v784 = vsub.s32 4, %v760
        %v785 = vsel %vm700, %v784, %v760
        %v786 = vsel %vm699, %v593, %v783
        %v787 = vsel %vm699, 0, %v785
        %v788 = vcosq.f32.pop %v786
        %v789 = vsinq.f32.pop %v786
        %vm790 = vweird.f32 %v593
        %v791 = vadd.s32 %v787, 3
        %v792 = vand.u32 %v791, 3
        %vm793 = vcmp.lt.s32.totalorder %v792, 2
        %vm794 = vcmp.eq.s32.totalorder %v792, 0
        %v795 = vxor.u32 %v789, 2147483648
        %v796 = vsel %vm794, %v788, %v795
        %vm797 = vcmp.eq.s32.totalorder %v792, 2
        %v798 = vxor.u32 %v788, 2147483648
        %v799 = vsel %vm797, %v798, %v789
        %v800 = vsel %vm793, %v796, %v799
        %v801 = vsel %vm790, nan, %v800
        %v802 = vand.u32 2147483647, %v697
        %v803 = vand.u32 2147483647, %v801
        %v804 = vand.u32 2147483647, %v592
        %vm805 = vcmp.le.f32.partialorder %v804, 0.7853982
        %vm806 = vcmp.lt.s32.totalorder %v592, 0
        %v807 = vand.u32 %v592, 2139095040
        %v808 = vshrl.u32 %v807, 23
        %v809 = vsub.s32 %v808, 127
        %v810 = vand.u32 2147483647, %v592
        %v811 = vand.u32 %v810, 8388607
        %v812 = vor.u32 %v811, 8388608
        %v813 = vsub.s32 0, %v812
        %v814 = vadd.s32 %v809, 1
        %vm815 = vcmp.gt.s32.totalorder %v814, 0
        %v816 = vsel %vm815, %v814, 0
        %v817 = vshrl.u32 %v816, 5
        %v818 = vand.u32 %v816, 31
        %v819 = vsub.s32 32, %v818
        %v820 = vshrl.u32 683565275, %v819
        %v821 = vshll.u32 683565275, %v818
        %v822 = vshrl.u32 2475754826, %v819
        %v823 = vor.u32 %v821, %v822
        %v824 = vshll.u32 2475754826, %v818
        %v825 = vshrl.u32 2131351028, %v819
        %v826 = vor.u32 %v824, %v825
        %v827 = vshll.u32 2131351028, %v818
        %v828 = vshrl.u32 2102212464, %v819
        %v829 = vor.u32 %v827, %v828
        %v830 = vshll.u32 2102212464, %v818
        %v831 = vshrl.u32 920167782, %v819
        %v832 = vor.u32 %v830, %v831
        %v833 = vshll.u32 920167782, %v818
        %v834 = vshrl.u32 1326507024, %v819
        %v835 = vor.u32 %v833, %v834
        %vm836 = vcmp.lt.s32.totalorder %v817, 1
        %vm837 = vcmp.lt.s32.totalorder %v817, 2
        %vm838 = vcmp.lt.s32.totalorder %v817, 3
        %vm839 = vcmp.lt.s32.totalorder %v817, 4
        %v840 = vsel %vm836, %v820, %v823
        %v841 = vsel %vm839, %v829, 2102212464
        %v842 = vsel %vm838, %v826, %v841
        %v843 = vsel %vm837, %v840, %v842
        %v844 = vsel %vm836, %v823, %v826
        %v845 = vsel %vm839, %v832, 920167782
        %v846 = vsel %vm838, %v829, %v845
        %v847 = vsel %vm837, %v844, %v846
        %v848 = vsel %vm836, %v826, %v829
        %v849 = vsel %vm839, %v835, 1326507024
        %v850 = vsel %vm838, %v832, %v849
        %v851 = vsel %vm837, %v848, %v850
        %v852 = vshll.u32 %v812, 8
        %v853 = vmul.u32.u64.compose %v852, %v851
        %v854 = vextract.low.u32 %v853
        %v855 = vextract.high.u32 %v853
        %v856 = vmul.u32.u64.compose %v852, %v847
        %v857 = vextract.low.u32 %v856
        %v858 = vextract.high.u32 %v856
        %v859 = vmul.u32 %v852, %v843
        %v860 = vadd.s32 %v855, %v857
        %vm861 = vc.u32 %v855, %v857
        %v862 = vadd.s32 %v858, 1
        %v863 = vsel %vm861, %v862, %v858
        %v864 = vadd.s32 %v859, %v863
        %v865 = vadd.s32 %v864, 536870912
        %v866 = vshrl.u32 %v865, 30
        %v867 = vshll.u32 %v866, 30
        %v868 = vsub.s32 %v864, %v867
        %vm869 = vcmp.lt.s32.totalorder %v868, 0
        %v870 = vsub.s32 0, %v868
        %v871 = vsel %vm869, %v870, %v868
        %v872 = vclz %v871
        %v873 = vsub.s32 %v872, 2
        %vm874 = vcmp.gt.s32.totalorder 0, %v873
        %v875 = vsel %vm874, 0, %v873
        %v876 = vsub.s32 32, %v875
        %v877 = vshll.u32 %v868, %v875
        %v878 = vshrl.u32 %v860, %v876
        %v879 = vor.u32 %v877, %v878
        %v880 = vsub.s32 4294967266, %v875
        %v881 = vadd.s32 %v880, 127
        %v882 = vshll.u32 %v881, 23
        %v883 = vor.u32 4788187, %v882
        %v884 = vand.u32 2147483647, %v883
        %v886 = vcvt.s32.f32 %v879
        %v887 = vmul.f32 %v886, %v884
        %v888 = vxor.u32 %v887, 2147483648
        %v889 = vsel %vm806, %v888, %v887
        %v890 = vsub.s32 4, %v866
        %v891 = vsel %vm806, %v890, %v866
        %v892 = vsel %vm805, %v592, %v889
        %v893 = vsel %vm805, 0, %v891
        %v894 = vcosq.f32.pop %v892
        %v895 = vsinq.f32.pop %v892
        %vm896 = vweird.f32 %v592
        %v897 = vand.u32 %v893, 3
        %vm898 = vcmp.lt.s32.totalorder %v897, 2
        %vm899 = vcmp.eq.s32.totalorder %v897, 0
        %v900 = vxor.u32 %v895, 2147483648
        %v901 = vsel %vm899, %v894, %v900
        %vm902 = vcmp.eq.s32.totalorder %v897, 2
        %v903 = vxor.u32 %v894, 2147483648
        %v904 = vsel %vm902, %v903, %v895
        %v905 = vsel %vm898, %v901, %v904
        %v906 = vsel %vm896, nan, %v905
        %v907 = vand.u32 2147483647, %v593
        %vm908 = vcmp.le.f32.partialorder %v907, 0.7853982
        %vm909 = vcmp.lt.s32.totalorder %v593, 0
        %v910 = vand.u32 %v593, 2139095040
        %v911 = vshrl.u32 %v910, 23
        %v912 = vsub.s32 %v911, 127
        %v913 = vand.u32 2147483647, %v593
        %v914 = vand.u32 %v913, 8388607
        %v915 = vor.u32 %v914, 8388608
        %v916 = vsub.s32 0, %v915
        %v917 = vadd.s32 %v912, 1
        %vm918 = vcmp.gt.s32.totalorder %v917, 0
        %v919 = vsel %vm918, %v917, 0
        %v920 = vshrl.u32 %v919, 5
        %v921 = vand.u32 %v919, 31
        %v922 = vsub.s32 32, %v921
        %v923 = vshrl.u32 683565275, %v922
        %v924 = vshll.u32 683565275, %v921
        %v925 = vshrl.u32 2475754826, %v922
        %v926 = vor.u32 %v924, %v925
        %v927 = vshll.u32 2475754826, %v921
        %v928 = vshrl.u32 2131351028, %v922
        %v929 = vor.u32 %v927, %v928
        %v930 = vshll.u32 2131351028, %v921
        %v931 = vshrl.u32 2102212464, %v922
        %v932 = vor.u32 %v930, %v931
        %v933 = vshll.u32 2102212464, %v921
        %v934 = vshrl.u32 920167782, %v922
        %v935 = vor.u32 %v933, %v934
        %v936 = vshll.u32 920167782, %v921
        %v937 = vshrl.u32 1326507024, %v922
        %v938 = vor.u32 %v936, %v937
        %vm939 = vcmp.lt.s32.totalorder %v920, 1
        %vm940 = vcmp.lt.s32.totalorder %v920, 2
        %vm941 = vcmp.lt.s32.totalorder %v920, 3
        %vm942 = vcmp.lt.s32.totalorder %v920, 4
        %v943 = vsel %vm939, %v923, %v926
        %v944 = vsel %vm942, %v932, 2102212464
        %v945 = vsel %vm941, %v929, %v944
        %v946 = vsel %vm940, %v943, %v945
        %v947 = vsel %vm939, %v926, %v929
        %v948 = vsel %vm942, %v935, 920167782
        %v949 = vsel %vm941, %v932, %v948
        %v950 = vsel %vm940, %v947, %v949
        %v951 = vsel %vm939, %v929, %v932
        %v952 = vsel %vm942, %v938, 1326507024
        %v953 = vsel %vm941, %v935, %v952
        %v954 = vsel %vm940, %v951, %v953
        %v955 = vshll.u32 %v915, 8
        %v956 = vmul.u32.u64.compose %v955, %v954
        %v957 = vextract.low.u32 %v956
        %v958 = vextract.high.u32 %v956
        %v959 = vmul.u32.u64.compose %v955, %v950
        %v960 = vextract.low.u32 %v959
        %v961 = vextract.high.u32 %v959
        %v962 = vmul.u32 %v955, %v946
        %v963 = vadd.s32 %v958, %v960
        %vm964 = vc.u32 %v958, %v960
        %v965 = vadd.s32 %v961, 1
        %v966 = vsel %vm964, %v965, %v961
        %v967 = vadd.s32 %v962, %v966
        %v968 = vadd.s32 %v967, 536870912
        %v969 = vshrl.u32 %v968, 30
        %v970 = vshll.u32 %v969, 30
        %v971 = vsub.s32 %v967, %v970
        %vm972 = vcmp.lt.s32.totalorder %v971, 0
        %v973 = vsub.s32 0, %v971
        %v974 = vsel %vm972, %v973, %v971
        %v975 = vclz %v974
        %v976 = vsub.s32 %v975, 2
        %vm977 = vcmp.gt.s32.totalorder 0, %v976
        %v978 = vsel %vm977, 0, %v976
        %v979 = vsub.s32 32, %v978
        %v980 = vshll.u32 %v971, %v978
        %v981 = vshrl.u32 %v963, %v979
        %v982 = vor.u32 %v980, %v981
        %v983 = vsub.s32 4294967266, %v978
        %v984 = vadd.s32 %v983, 127
        %v985 = vshll.u32 %v984, 23
        %v986 = vor.u32 4788187, %v985
        %v987 = vand.u32 2147483647, %v986
        %v989 = vcvt.s32.f32 %v982
        %v990 = vmul.f32 %v989, %v987
        %v991 = vxor.u32 %v990, 2147483648
        %v992 = vsel %vm909, %v991, %v990
        %v993 = vsub.s32 4, %v969
        %v994 = vsel %vm909, %v993, %v969
        %v995 = vsel %vm908, %v593, %v992
        %v996 = vsel %vm908, 0, %v994
        %v997 = vcosq.f32.pop %v995
        %v998 = vsinq.f32.pop %v995
        %vm999 = vweird.f32 %v593
        %v1000 = vand.u32 %v996, 3
        %vm1001 = vcmp.lt.s32.totalorder %v1000, 2
        %vm1002 = vcmp.eq.s32.totalorder %v1000, 0
        %v1003 = vxor.u32 %v998, 2147483648
        %v1004 = vsel %vm1002, %v997, %v1003
        %vm1005 = vcmp.eq.s32.totalorder %v1000, 2
        %v1006 = vxor.u32 %v997, 2147483648
        %v1007 = vsel %vm1005, %v1006, %v998
        %v1008 = vsel %vm1001, %v1004, %v1007
        %v1009 = vsel %vm999, nan, %v1008
        %v1010 = vmul.f32 %v802, %v570
        %v1011 = vmul.f32 %v803, %v571
        %v1012 = vadd.f32 %v555, %v1010
        %v1013 = vadd.f32 %v556, %v1011
        %v1014 = vadd.f32 %v578, 0.0
        %v1015 = vadd.f32 %v579, 0.0
        %vm1016 = vcmp.gt.f32.partialorder %v269, 0.05
        %vm1017 = vcmp.gt.f32.partialorder %v270, 0.05
        %v1018 = vsel %vm1016, 1, 0
        %v1019 = vsel %vm1017, 1, 0
        %v1020 = vcvt.s32.f32 %v1018
        %v1021 = vcvt.s32.f32 %v1019
        %v1022 = vmul.f32 %v578, %v1020
        %v1023 = vmul.f32 %v579, %v1021
        %v1024 = vadd.f32 %v1022, 0.0
        %v1025 = vadd.f32 %v1023, 0.0
        %v1026 = vmul.f32 %v586, %v1022
        %v1027 = vmul.f32 %v587, %v1023
        %v1028 = vmul.f32 %v1012, %v1026
        %v1029 = vmul.f32 %v1013, %v1027
        %v1030 = vadd.f32 %v1028, 0.0
        %v1031 = vadd.f32 %v1029, 0.0
        %s1032 = scalar_lea.vmem %s169, 184 [#allocation2]
        %v1033 = vld [vmem:[%s1032] sm:$0xf]
        %v1034 = vld [vmem:[%s1032 + $0x4] sm:$0xf]
        %v1035 = vunpack.c.l.bf16 %v1033
        %v1036 = vunpack.c.l.bf16 %v1034
        %s1037 = scalar_lea.vmem %s169, 192 [#allocation2]
        %v1038 = vld [vmem:[%s1037] sm:$0xf]
        %v1039 = vld [vmem:[%s1037 + $0x4] sm:$0xf]
        %v1040 = vunpack.c.l.bf16 %v1038
        %v1041 = vunpack.c.l.bf16 %v1039
        %v1042 = vmax.f32 %v1035, %v1040
        %v1043 = vmax.f32 %v1036, %v1041
        %v1044 = vsub.f32 %v1035, %v1040
        %v1045 = vsub.f32 %v1036, %v1041
        %v1046 = vand.u32 2147483647, %v1044
        %v1047 = vand.u32 2147483647, %v1045
        %v1048 = vsub.f32 0.0, %v1046
        %v1049 = vsub.f32 0.0, %v1047
        %v1050 = vmul.f32 %v1048, 1.442695
        %v1051 = vpow.pop %v1050
        %v1052 = vmul.f32 %v1049, 1.442695
        %v1053 = vpow.pop %v1052
        %v1054 = vadd.f32 %v1051, 1.0
        %v1055 = vlog2.pop %v1054
        %v1056 = vmul.f32 %v1055, 0.6931472
        %v1057 = vmul.f32 -0.5, %v1051
        %v1058 = vadd.f32 %v1057, 1.0
        %v1059 = vmul.f32 %v1058, %v1051
        %v1060 = vand.u32 2147483647, %v1051
        %vm1061 = vcmp.lt.f32.partialorder %v1060, 0.0004427343
        %v1062 = vsel %vm1061, %v1059, %v1056
        %v1063 = vadd.f32 %v1053, 1.0
        %v1064 = vlog2.pop %v1063
        %v1065 = vmul.f32 %v1064, 0.6931472
        %v1066 = vmul.f32 -0.5, %v1053
        %v1067 = vadd.f32 %v1066, 1.0
        %v1068 = vmul.f32 %v1067, %v1053
        %v1069 = vand.u32 2147483647, %v1053
        %vm1070 = vcmp.lt.f32.partialorder %v1069, 0.0004427343
        %v1071 = vsel %vm1070, %v1068, %v1065
        %v1072 = vadd.f32 %v1042, %v1062
        %v1073 = vadd.f32 %v1043, %v1071
        %vm1074 = vcmp.gt.f32.partialorder %v590, 0.0
        %vm1075 = vcmp.gt.f32.partialorder %v591, 0.0
        %v1076 = vsel %vm1074, %v1040, %v1035
        %v1077 = vsel %vm1075, %v1041, %v1036
        %v1078 = vsub.f32 %v1072, %v1076
        %v1079 = vsub.f32 %v1073, %v1077
        %v1080 = vsub.f32 1.0, %v906
        %v1081 = vsub.f32 1.0, %v1009
        %v1082 = vmul.f32 %v1080, %v1022
        %v1083 = vmul.f32 %v1081, %v1023
        %v1084 = vadd.f32 %v1082, 0.0
        %v1085 = vadd.f32 %v1083, 0.0
        %v1086 = vmul.f32 %v1078, %v1022
        %v1087 = vmul.f32 %v1079, %v1023
        %v1088 = vadd.f32 %v1086, 0.0
        %v1089 = vadd.f32 %v1087, 0.0
        %v1090 = vld [vmem:[%s187] sm:$0xff]
        %v1091 = vld [vmem:[%s187 + $0x8] sm:$0xff]
        %v1092 = vadd.f32 %v1090, %v297
        %v1093 = vadd.f32 %v1091, %v298
        %1094 = vst [vmem:[%s187] sm:$0xff] %v1092
        %1095 = vst [vmem:[%s187 + $0x8] sm:$0xff] %v1093
        %s1096 = scalar_lea.vmem %s187, 16 [#allocation5]
        %v1097 = vld [vmem:[%s1096] sm:$0xff]
        %v1098 = vld [vmem:[%s1096 + $0x8] sm:$0xff]
        %v1099 = vadd.f32 %v1097, %v1014
        %v1100 = vadd.f32 %v1098, %v1015
        %1101 = vst [vmem:[%s1096] sm:$0xff] %v1099
        %1102 = vst [vmem:[%s1096 + $0x8] sm:$0xff] %v1100
        %s1103 = scalar_lea.vmem %s187, 32 [#allocation5]
        %v1104 = vld [vmem:[%s1103] sm:$0xff]
        %v1105 = vld [vmem:[%s1103 + $0x8] sm:$0xff]
        %v1106 = vadd.f32 %v1104, %v1024
        %v1107 = vadd.f32 %v1105, %v1025
        %1108 = vst [vmem:[%s1103] sm:$0xff] %v1106
        %1109 = vst [vmem:[%s1103 + $0x8] sm:$0xff] %v1107
        %s1110 = scalar_lea.vmem %s187, 48 [#allocation5]
        %v1111 = vld [vmem:[%s1110] sm:$0xff]
        %v1112 = vld [vmem:[%s1110 + $0x8] sm:$0xff]
        %v1113 = vadd.f32 %v1111, %v1030
        %v1114 = vadd.f32 %v1112, %v1031
        %1115 = vst [vmem:[%s1110] sm:$0xff] %v1113
        %1116 = vst [vmem:[%s1110 + $0x8] sm:$0xff] %v1114
        %s1117 = scalar_lea.vmem %s187, 64 [#allocation5]
        %v1118 = vld [vmem:[%s1117] sm:$0xff]
        %v1119 = vld [vmem:[%s1117 + $0x8] sm:$0xff]
        %v1120 = vadd.f32 %v1118, %v1084
        %v1121 = vadd.f32 %v1119, %v1085
        %1122 = vst [vmem:[%s1117] sm:$0xff] %v1120
        %1123 = vst [vmem:[%s1117 + $0x8] sm:$0xff] %v1121
        %s1124 = scalar_lea.vmem %s187, 80 [#allocation5]
        %v1125 = vld [vmem:[%s1124] sm:$0xff]
        %v1126 = vld [vmem:[%s1124 + $0x8] sm:$0xff]
        %v1127 = vadd.f32 %v1125, %v1088
        %v1128 = vadd.f32 %v1126, %v1089
        %1129 = vst [vmem:[%s1124] sm:$0xff] %v1127
        %1130 = vst [vmem:[%s1124 + $0x8] sm:$0xff] %v1128
        %s1131 = sand.u32 %s77, 1
        %s1132 = scalar_lea.sflag [#allocation4], %s1131
        %s1133 = sand.u32 %s77, 1
        %s1134 = smul.addr %s1133, 96
        %s1135 = scalar_lea.vmem [#allocation5], %s1134
        // Predicated region
        $region33: #{tpu_custom_call.1} parent=23 // pred_check
          %p1136 = pneg %p87
        $region34: #{tpu_custom_call.1} parent=23 // pred_check_branch
          %1138 = sbr.rel (%p1136) target = $region36
        $region35: #{tpu_custom_call.1} parent=23 // pred_region
          %s1140 = ssub.s32 1536, 1536
          %1141 = vsyncadd %s1132, %s1140
          %s1142 = smul.addr %s24, 12
          %s1143 = smul.addr %s23, 24
          %s1144 = sadd.s32 %s1142, %s1143
          %s1145 = smul.addr %s1144, 128
          %s1146 = scalar_lea.hbm %s1, %s1145
          %s1147 = sshll.u32 %s1135, 4
          %s1148 = int_to_ptr.vmem [resolvable:$true] %s1147
          %1153 = dma.vmem_to_hbm [thread:$0]  %s1148, 1536, %s1146, %s1132, 128, 128, 8
        $region36: #{tpu_custom_call.1} parent=23 // pred_fallthru
          _
      $region24: #{tpu_custom_call.1} parent=5 // pred_fallthru
        _
      %p1154 = scmp.le.s32.totalorder 2, %s13
      // Predicated region
      $region37: #{tpu_custom_call.1} parent=5 // pred_check
        %p1155 = pneg %p1154
      $region38: #{tpu_custom_call.1} parent=5 // pred_check_branch
        %1157 = sbr.rel (%p1155) target = $region40
      $region39: #{tpu_custom_call.1} parent=5 // pred_region
        %s1158 = ssub.s32 %s13, 2
        // Predicated region
        $region41: #{tpu_custom_call.1} parent=39 // pred_check
          %p1159 = pneg %p93
        $region42: #{tpu_custom_call.1} parent=39 // pred_check_branch
          %1161 = sbr.rel (%p1159) target = $region44
        $region43: #{tpu_custom_call.1} parent=39 // pred_region
          %s1162 = sand.u32 %s78, 1
          %s1163 = scalar_lea.sflag [#allocation4], %s1162
          %s1164 = sand.u32 %s78, 1
          %s1165 = smul.addr %s1164, 96
          %s1166 = scalar_lea.vmem [#allocation5], %s1165
          %1167 = dma.done %s1163, 1536
        $region44: #{tpu_custom_call.1} parent=39 // pred_fallthru
          _
      $region40: #{tpu_custom_call.1} parent=5 // pred_fallthru
        _
    $region6: #{tpu_custom_call.1} parent=1 // loop_footer
      %s17 = sadd.s32 1, %s13
    $region7: #{tpu_custom_call.1} parent=1 // loop_footer_branch
      %12 = sbr.rel target = $region3
    $region8: #{tpu_custom_call.1} parent=1 // loop_exit
      _
    %1168 = vsyncpa [#allocation3], 1
    %s1169 = scalar_lea.sflag [#allocation3], 1
    %1170 = vsyncpa %s1169, 1
    %1171 = vsyncpa [#allocation4], 1
    %s1172 = scalar_lea.sflag [#allocation4], 1
    %1173 = vsyncpa %s1172, 1

</llo_original>
